<compile_context>
chip_gen: v6e
topology: v6e:2x2x1
jax: 0.10.0
libtpu: 0.0.40
codegen_flags: <defaults>
</compile_context>

<pallas_src>
import functools
import math

import jax
import jax.numpy as jnp
from jax import lax
from jax.experimental import pallas as pl
from jax.experimental.pallas import tpu as pltpu

ACT_DTYPE = jnp.bfloat16  # inter-layer activation storage dtype (halves HBM traffic)


def _ru(x, m):
    return ((x + m - 1) // m) * m


def _pick_tile(total, candidates):
    for c in candidates:
        if total % c == 0:
            return c
    return candidates[-1]


@functools.lru_cache(maxsize=None)
def _vmem_limit():
    """Generation-aware scoped VMEM limit (leave headroom on v7x's 64 MiB)."""
    try:
        cap = int(getattr(pltpu.get_tpu_info(), "vmem_capacity_bytes"))
    except Exception:
        cap = 128 * 1024 * 1024
    return int(min(48 * 1024 * 1024, max(cap // 2, 16 * 1024 * 1024)))


# ----------------------------------------------------------------------------
# Pallas kernel 1: tiled multi-input matmul with fused bias/residual/act/gate.
# Handles every 1x1 conv, the CA MLPs and the im2col fallback (stride-2 / 7x7).
# ----------------------------------------------------------------------------
@functools.partial(jax.jit, static_argnames=("n_out", "act", "out_dtype"))
def fused_matmul(a_list, w_list, bias_pad, gate, residual, *, n_out, act, out_dtype):
    """sum_i a_i @ w_i + bias, then optional residual add, activation, x*g+x gate.

    a_list: tuple of (M, K_i) activations (cast to bf16 here).
    w_list: tuple of (Kp_i, Np) bf16 weights pre-padded to multiples of 128.
    bias_pad: (1, Np) float32.  gate: optional (M, 1).  residual: optional (M, <=Np).
    Returns (M, n_out) in out_dtype.  K axis is innermost / 'arbitrary' (accumulator).
    """
    n_in = len(a_list)
    M = a_list[0].shape[0]
    Np = w_list[0].shape[1]
    Kp_list = [w.shape[0] for w in w_list]
    if n_in > 1:
        assert all(kk == Kp_list[0] for kk in Kp_list)
        assert all(a.shape[1] == Kp_list[0] for a in a_list), \
            "multi-input conv requires equal, 128-aligned channel counts"
    Kp = Kp_list[0]

    # One large M tile (pad M instead of shrinking the tile to a divisor).
    TM = min(512, _ru(M, 8))
    Mp = _ru(M, TM)
    TK = _pick_tile(Kp, (1024, 768, 512, 256, 128))
    TN = _pick_tile(Np, (512, 256, 128))
    # Keep >= 2 blocks on a parallel axis when the M grid collapses (v7x: 2 TCs).
    if Mp // TM == 1 and Np // TN == 1 and Np >= 256 and (Np // 2) % 128 == 0:
        TN = Np // 2

    def pad_a(a):
        a = a.astype(jnp.bfloat16)
        K = a.shape[1]
        if K != Kp or M != Mp:
            a = jnp.pad(a, ((0, Mp - M), (0, Kp - K)))
        return a

    a_pad = tuple(pad_a(a) for a in a_list)
    w_pad = tuple(w.astype(jnp.bfloat16) for w in w_list)

    has_gate = gate is not None
    has_res = residual is not None

    in_specs = []
    args = []
    for a, w in zip(a_pad, w_pad):
        in_specs.append(pl.BlockSpec((TM, TK), lambda i, j, k: (i, k)))
        in_specs.append(pl.BlockSpec((TK, TN), lambda i, j, k: (k, j)))
        args.extend([a, w])
    in_specs.append(pl.BlockSpec((1, TN), lambda i, j, k: (0, j)))
    args.append(bias_pad.astype(jnp.float32))
    if has_res:
        r = residual.astype(jnp.bfloat16)
        if M != Mp or r.shape[1] != Np:
            r = jnp.pad(r, ((0, Mp - M), (0, Np - r.shape[1])))
        in_specs.append(pl.BlockSpec((TM, TN), lambda i, j, k: (i, j)))
        args.append(r)
    if has_gate:
        g = gate.astype(jnp.float32)
        if M != Mp:
            g = jnp.pad(g, ((0, Mp - M), (0, 0)))
        in_specs.append(pl.BlockSpec((TM, 1), lambda i, j, k: (i, 0)))
        args.append(g)

    def kernel(*refs):
        a_refs = [refs[2 * t] for t in range(n_in)]
        w_refs = [refs[2 * t + 1] for t in range(n_in)]
        idx = 2 * n_in
        bias_ref = refs[idx]
        idx += 1
        res_ref = refs[idx] if has_res else None
        idx += int(has_res)
        gate_ref = refs[idx] if has_gate else None
        idx += int(has_gate)
        o_ref = refs[idx]
        acc_ref = refs[idx + 1]

        @pl.when(pl.program_id(2) == 0)
        def _():
            acc_ref[...] = jnp.zeros_like(acc_ref)

        acc = acc_ref[...]
        for a_ref, w_ref in zip(a_refs, w_refs):
            acc += jnp.dot(a_ref[...], w_ref[...],
                           preferred_element_type=jnp.float32)
        acc_ref[...] = acc

        @pl.when(pl.program_id(2) == pl.num_programs(2) - 1)
        def _():
            r = acc_ref[...] + bias_ref[...]
            if has_res:
                r = r + res_ref[...].astype(jnp.float32)
            if act == "relu":
                r = jnp.maximum(r, 0.0)
            elif act == "sigmoid":
                r = jax.nn.sigmoid(r)
            if has_gate:
                # reference order: y = act(conv(x)); y = y * map + y
                r = r * gate_ref[...] + r
            o_ref[...] = r.astype(out_dtype)

    flops = 2 * Mp * Np * Kp * n_in
    bytes_accessed = (Mp * Kp * 2 * n_in + Kp * Np * 2 * n_in
                      + Mp * Np * jnp.dtype(out_dtype).itemsize)

    out = pl.pallas_call(
        kernel,
        out_shape=jax.ShapeDtypeStruct((Mp, Np), out_dtype),
        grid_spec=pltpu.PrefetchScalarGridSpec(
            num_scalar_prefetch=0,
            grid=(Mp // TM, Np // TN, Kp // TK),
            in_specs=in_specs,
            out_specs=pl.BlockSpec((TM, TN), lambda i, j, k: (i, j)),
            scratch_shapes=[pltpu.VMEM((TM, TN), jnp.float32)],
        ),
        compiler_params=pltpu.CompilerParams(
            dimension_semantics=("parallel", "parallel", "arbitrary"),
            vmem_limit_bytes=_vmem_limit()),
        cost_estimate=pl.CostEstimate(flops=flops, transcendentals=0,
                                      bytes_accessed=int(bytes_accessed)),
    )(*args)
    if Mp != M or Np != n_out:
        out = out[:M, :n_out]
    return out


# ----------------------------------------------------------------------------
# Pallas kernel 2: stride-1 same-padding KxK conv without HBM im2col.
# The spatially padded activation is kept flat (B, Hp*Wp, C) in HBM; each grid
# step manually DMAs one row window (incl. the halo) into VMEM and accumulates
# the k*k shifted matmuls on the MXU.  Supports multi-input channel concat
# (weight pre-split along K) -> also removes the decoder concat.
# ----------------------------------------------------------------------------
@functools.partial(jax.jit, static_argnames=("k", "n_out", "act", "out_dtype"))
def conv_s1_call(xs, w_list, bias_pad, *, k, n_out, act, out_dtype):
    n_in = len(xs)
    B, H, W, _ = xs[0].shape
    cins = tuple(int(x.shape[-1]) for x in xs)
    Np = w_list[0].shape[1]
    pad = k // 2
    Wp = W + 2 * pad
    M = H * Wp                           # padded-flat output rows per batch
    TM = min(512, _ru(M, 8))
    Mp = _ru(M, TM)
    TN = min(256, Np)
    halo = _ru(2 * pad * Wp + 2 * pad, 8)
    WIN = TM + halo
    L_need = Mp + halo
    Hp_rows = -(-L_need // Wp)           # ceil
    extra_bottom = Hp_rows - H - pad     # >= pad by construction

    def prep(x):
        x = x.astype(ACT_DTYPE)
        xpd = jnp.pad(x, ((0, 0), (pad, extra_bottom), (pad, pad), (0, 0)))
        return xpd.reshape(B, Hp_rows * Wp, x.shape[-1])

    x_flat = tuple(prep(x) for x in xs)
    w_bf = tuple(w.astype(jnp.bfloat16) for w in w_list)
    bias = bias_pad.astype(jnp.float32)

    in_specs = []
    args = []
    for i in range(n_in):
        in_specs.append(pl.BlockSpec(memory_space=pl.ANY))      # raw HBM ref
        args.append(x_flat[i])
        in_specs.append(pl.BlockSpec((w_bf[i].shape[0], TN), lambda b, m, n: (0, n)))
        args.append(w_bf[i])
    in_specs.append(pl.BlockSpec((1, TN), lambda b, m, n: (0, n)))
    args.append(bias)

    scratch = [pltpu.VMEM((WIN, cins[i]), ACT_DTYPE) for i in range(n_in)]
    scratch.append(pltpu.SemaphoreType.DMA((n_in,)))

    def kernel(*refs):
        x_refs = [refs[2 * i] for i in range(n_in)]
        w_refs = [refs[2 * i + 1] for i in range(n_in)]
        bias_ref = refs[2 * n_in]
        o_ref = refs[2 * n_in + 1]
        abufs = [refs[2 * n_in + 2 + i] for i in range(n_in)]
        sem = refs[2 * n_in + 2 + n_in]

        b = pl.program_id(0)
        m = pl.program_id(1)
        n = pl.program_id(2)
        start = pl.multiple_of(m * TM, 8)

        # The halo window only depends on (b, m); n is the innermost axis, so
        # fetch once per (b, m) and reuse across all output-channel tiles.
        @pl.when(n == 0)
        def _():
            for i in range(n_in):
                pltpu.make_async_copy(
                    x_refs[i].at[b, pl.ds(start, WIN), :], abufs[i], sem.at[i]
                ).start()
            for i in range(n_in):
                pltpu.make_async_copy(
                    x_refs[i].at[b, pl.ds(start, WIN), :], abufs[i], sem.at[i]
                ).wait()

        acc = jnp.zeros((TM, TN), jnp.float32)
        for i in range(n_in):
            ci = cins[i]
            for q in range(k * k):
                ki, kj = q // k, q % k
                off = ki * Wp + kj
                a = abufs[i][pl.ds(off, TM), :]
                wsl = w_refs[i][pl.ds(q * ci, ci), :]
                acc = acc + jnp.dot(a, wsl, preferred_element_type=jnp.float32)
        r = acc + bias_ref[...]
        if act == "relu":
            r = jnp.maximum(r, 0.0)
        elif act == "sigmoid":
            r = jax.nn.sigmoid(r)
        o_ref[0, :, :] = r.astype(out_dtype)

    kk_total = sum(k * k * c for c in cins)
    flops = 2 * B * Mp * Np * kk_total
    bytes_accessed = int(B * (Mp + halo) * sum(cins) * 2
                         + B * (Mp // TM) * kk_total * Np * 2
                         + B * Mp * Np * jnp.dtype(out_dtype).itemsize)

    out = pl.pallas_call(
        kernel,
        out_shape=jax.ShapeDtypeStruct((B, Mp, Np), out_dtype),
        grid_spec=pltpu.PrefetchScalarGridSpec(
            num_scalar_prefetch=0,
            grid=(B, Mp // TM, Np // TN),
            in_specs=in_specs,
            out_specs=pl.BlockSpec((1, TM, TN), lambda b, m, n: (b, m, n)),
            scratch_shapes=scratch,
        ),
        compiler_params=pltpu.CompilerParams(
            dimension_semantics=("parallel", "parallel", "arbitrary"),
            vmem_limit_bytes=_vmem_limit()),
        cost_estimate=pl.CostEstimate(flops=flops, transcendentals=0,
                                      bytes_accessed=bytes_accessed),
    )(*args)

    out = out[:, :H * Wp, :n_out].reshape(B, H, Wp, n_out)[:, :, :W, :]
    return out


def conv3x3_s1(xs, p, act="relu", out_dtype=ACT_DTYPE):
    w_list, b_pad, k, n_out = p
    return conv_s1_call(tuple(xs), tuple(w_list), b_pad,
                        k=k, n_out=n_out, act=act, out_dtype=out_dtype)


# ----------------------------------------------------------------------------
# Pallas kernel 3: channel mean/max reduction (SpatialAttention), row-tiled,
# lane-dense (128-wide) output.
# ----------------------------------------------------------------------------
@jax.jit
def channel_stats(x2d):
    """x2d: (R, C) -> (R, 2) f32 with [mean over C, max over C]."""
    R, C = x2d.shape
    Cp = _ru(C, 128)
    Rp = _ru(R, 16)
    TR = _pick_tile(Rp, (512, 256, 128, 64, 32, 16))
    xp = x2d.astype(jnp.bfloat16)
    if (R, C) != (Rp, Cp):
        xp = jnp.pad(xp, ((0, Rp - R), (0, Cp - C)))
    need_mask = Cp != C

    def kernel(x_ref, o_ref):
        x = x_ref[...].astype(jnp.float32)
        if need_mask:
            col = lax.broadcasted_iota(jnp.int32, x.shape, 1)
            valid = col < C
            s = jnp.sum(jnp.where(valid, x, 0.0), axis=1, keepdims=True)
            mx = jnp.max(jnp.where(valid, x, -jnp.inf), axis=1, keepdims=True)
        else:
            s = jnp.sum(x, axis=1, keepdims=True)
            mx = jnp.max(x, axis=1, keepdims=True)
        mean = s * (1.0 / C)
        ocol = lax.broadcasted_iota(jnp.int32, (TR, 128), 1)
        o_ref[...] = jnp.where(ocol == 0, mean, jnp.where(ocol == 1, mx, 0.0))

    out = pl.pallas_call(
        kernel,
        out_shape=jax.ShapeDtypeStruct((Rp, 128), jnp.float32),
        grid_spec=pltpu.PrefetchScalarGridSpec(
            num_scalar_prefetch=0, grid=(Rp // TR,),
            in_specs=[pl.BlockSpec((TR, Cp), lambda i: (i, 0))],
            out_specs=pl.BlockSpec((TR, 128), lambda i: (i, 0))),
        compiler_params=pltpu.CompilerParams(
            dimension_semantics=("parallel",)),
    )(xp)
    return out[:R, :2]


# ----------------------------------------------------------------------------
# Pallas kernel 4: fused bmm(CA, SA) + x*M + x  (self-modality attention refine)
# ----------------------------------------------------------------------------
@jax.jit
def smar_fuse(x, ca, sa):
    """x:(B,P,C), ca:(B,1,C), sa:(B,P,1) -> x * (ca*sa) + x  (rank-1 bmm fused)."""
    B, P, C = x.shape

    def kernel(x_ref, ca_ref, sa_ref, o_ref):
        xv = x_ref[...].astype(jnp.float32)
        m = ca_ref[...] * sa_ref[...]
        o_ref[...] = (xv * m + xv).astype(ACT_DTYPE)

    spec = lambda shp: pl.BlockSpec(shp, lambda i: (i, 0, 0))
    return pl.pallas_call(
        kernel,
        out_shape=jax.ShapeDtypeStruct((B, P, C), ACT_DTYPE),
        grid_spec=pltpu.PrefetchScalarGridSpec(
            num_scalar_prefetch=0, grid=(B,),
            in_specs=[spec((1, P, C)), spec((1, 1, C)), spec((1, P, 1))],
            out_specs=spec((1, P, C))),
        compiler_params=pltpu.CompilerParams(
            dimension_semantics=("parallel",)),
    )(x.astype(ACT_DTYPE), ca.astype(jnp.float32), sa.astype(jnp.float32))


# ----------------------------------------------------------------------------
# Pallas kernel 5: cross-modality weighting refinement (cmWR).  Per-pixel
# modality logits computed with three small MXU matmuls (weight (3C,128),
# columns 0..2 carry the logits), exact softmax, residual refinement.
# ----------------------------------------------------------------------------
@jax.jit
def cmwr_fuse(r, d, rd, wl, bias):
    """r,d,rd:(R,C); wl:(3C,128) bf16; bias:(1,128) f32."""
    R, C = r.shape
    Rp = _ru(R, 16)
    TR = _pick_tile(Rp, (512, 256, 128, 64, 32, 16))

    def prep(x):
        x = x.astype(ACT_DTYPE)
        if Rp != R:
            x = jnp.pad(x, ((0, Rp - R), (0, 0)))
        return x

    rp, dp, rdp = prep(r), prep(d), prep(rd)
    wlb = wl.astype(jnp.bfloat16)
    b = bias.astype(jnp.float32)

    def kernel(r_ref, d_ref, rd_ref, w_ref, b_ref, or_ref, od_ref, ord_ref):
        rf = r_ref[...].astype(jnp.float32)
        df = d_ref[...].astype(jnp.float32)
        rdf = rd_ref[...].astype(jnp.float32)
        lg = (jnp.dot(r_ref[...], w_ref[0:C, :], preferred_element_type=jnp.float32)
              + jnp.dot(d_ref[...], w_ref[C:2 * C, :], preferred_element_type=jnp.float32)
              + jnp.dot(rd_ref[...], w_ref[2 * C:3 * C, :], preferred_element_type=jnp.float32)
              + b_ref[...])
        l0, l1, l2 = lg[:, 0:1], lg[:, 1:2], lg[:, 2:3]
        mx = jnp.maximum(jnp.maximum(l0, l1), l2)
        e0, e1, e2 = jnp.exp(l0 - mx), jnp.exp(l1 - mx), jnp.exp(l2 - mx)
        inv = 1.0 / (e0 + e1 + e2)
        fused = rf * (e0 * inv) + df * (e1 * inv) + rdf * (e2 * inv)
        or_ref[...] = (rf + fused).astype(ACT_DTYPE)
        od_ref[...] = (df + fused).astype(ACT_DTYPE)
        ord_ref[...] = (rdf + fused).astype(ACT_DTYPE)

    feat = lambda: pl.BlockSpec((TR, C), lambda i: (i, 0))
    outs = pl.pallas_call(
        kernel,
        out_shape=tuple(jax.ShapeDtypeStruct((Rp, C), ACT_DTYPE) for _ in range(3)),
        grid_spec=pltpu.PrefetchScalarGridSpec(
            num_scalar_prefetch=0, grid=(Rp // TR,),
            in_specs=[feat(), feat(), feat(),
                      pl.BlockSpec((3 * C, 128), lambda i: (0, 0)),
                      pl.BlockSpec((1, 128), lambda i: (0, 0))],
            out_specs=(feat(), feat(), feat())),
        compiler_params=pltpu.CompilerParams(
            dimension_semantics=("parallel",)),
    )(rp, dp, rdp, wlb, b)
    if Rp != R:
        outs = tuple(o[:R] for o in outs)
    return outs


# ----------------------------------------------------------------------------
# Conv / pooling / resize glue (im2col fallback, reshape, gather) in plain JAX
# ----------------------------------------------------------------------------
def im2col(x, kh, kw, stride, pad):
    B, H, W, C = x.shape
    if pad:
        x = jnp.pad(x, ((0, 0), (pad, pad), (pad, pad), (0, 0)))
    Hp, Wpad = x.shape[1], x.shape[2]
    Ho = (Hp - kh) // stride + 1
    Wo = (Wpad - kw) // stride + 1
    cols = []
    for i in range(kh):
        for j in range(kw):
            cols.append(x[:, i:i + stride * (Ho - 1) + 1:stride,
                          j:j + stride * (Wo - 1) + 1:stride, :])
    # TODO(synk): only used for stride-2 / 7x7 convs now; fold these into the
    # halo-window kernel (strided pl.ds loads) to remove the last im2col copies.
    patches = jnp.concatenate(cols, axis=-1)
    return patches.reshape(B * Ho * Wo, kh * kw * C), Ho, Wo


def conv_mm(x, p, stride=1, pad=0, act="none", gate=None, residual=None,
            out_dtype=ACT_DTYPE):
    """NHWC conv (+folded BN) via fused_matmul with bias/residual/act/gate fused."""
    w_pad, b_pad, kh, kw, n_out = p
    B, H, W, _ = x.shape
    if kh == 1 and kw == 1 and stride == 1 and pad == 0:
        Ho, Wo = H, W
        cols = x.reshape(B * H * W, x.shape[-1])
    else:
        cols, Ho, Wo = im2col(x, kh, kw, stride, pad)
    M = B * Ho * Wo
    gate2 = None if gate is None else gate.reshape(M, 1)
    res2 = None if residual is None else residual.reshape(M, residual.shape[-1])
    out = fused_matmul((cols,), (w_pad,), b_pad, gate2, res2,
                       n_out=n_out, act=act, out_dtype=out_dtype)
    return out.reshape(B, Ho, Wo, n_out)


def conv1x1_multi(xs, p, act="relu", gate=None, out_dtype=ACT_DTYPE):
    """1x1 conv over channel-concat(xs) without materializing the concat in HBM."""
    w_pad, b_pad, _, _, n_out = p
    B, H, W, _ = xs[0].shape
    M = B * H * W
    chans = [x.shape[-1] for x in xs]
    assert sum(chans) == w_pad.shape[0]
    offs = [0]
    for c in chans:
        offs.append(offs[-1] + c)
    w_list = tuple(w_pad[offs[i]:offs[i + 1], :] for i in range(len(xs)))
    a_list = tuple(x.reshape(M, c) for x, c in zip(xs, chans))
    gate2 = None if gate is None else gate.reshape(M, 1)
    out = fused_matmul(a_list, w_list, b_pad, gate2, None,
                       n_out=n_out, act=act, out_dtype=out_dtype)
    return out.reshape(B, H, W, n_out)


def dense(a, p, act="none", out_dtype=ACT_DTYPE):
    w_pad, b_pad, _, _, n_out = p
    return fused_matmul((a,), (w_pad,), b_pad, None, None,
                        n_out=n_out, act=act, out_dtype=out_dtype)


def maxpool3x3s2(x):
    return lax.reduce_window(
        x, jnp.array(-jnp.inf, dtype=x.dtype), lax.max,
        window_dimensions=(1, 3, 3, 1), window_strides=(1, 2, 2, 1),
        padding=((0, 0), (1, 1), (1, 1), (0, 0)))


def bilinear_resize(x, oh, ow):
    """align_corners=True bilinear resize, NHWC; gathers stay in x.dtype (bf16)."""
    B, H, W, C = x.shape
    if oh == H and ow == W:
        return x
    dt = x.dtype

    def coords(o, i):
        if o == 1 or i == 1:
            return jnp.zeros((o,), jnp.float32)
        return jnp.arange(o, dtype=jnp.float32) * ((i - 1) / (o - 1))

    ys, xs = coords(oh, H), coords(ow, W)
    y0 = jnp.floor(ys).astype(jnp.int32)
    y1 = jnp.minimum(y0 + 1, H - 1)
    wy = (ys - y0.astype(jnp.float32))[None, :, None, None]
    x0 = jnp.floor(xs).astype(jnp.int32)
    x1 = jnp.minimum(x0 + 1, W - 1)
    wx = (xs - x0.astype(jnp.float32))[None, None, :, None]

    rows0 = jnp.take(x, y0, axis=1)
    rows1 = jnp.take(x, y1, axis=1)

    def horiz(r):
        a = jnp.take(r, x0, axis=2).astype(jnp.float32)
        b = jnp.take(r, x1, axis=2).astype(jnp.float32)
        return a * (1.0 - wx) + b * wx

    top, bot = horiz(rows0), horiz(rows1)
    return (top * (1.0 - wy) + bot * wy).astype(dt)


# ----------------------------------------------------------------------------
# Attention / cmWR modules
# ----------------------------------------------------------------------------
def spatial_attention(x, p):
    """CBAM-style SA: sigmoid(conv7x7([mean_c, max_c])) -> (B,H,W,1)."""
    B, H, W, C = x.shape
    stats = channel_stats(x.reshape(B * H * W, C)).reshape(B, H, W, 2)
    return conv_mm(stats, p, stride=1, pad=3, act="sigmoid")


def channel_attention(x, p_fc1, p_fc2):
    """CBAM-style CA with shared MLP -> (B, C) f32; avg & max rows in one pass."""
    B = x.shape[0]
    avg = jnp.mean(x.astype(jnp.float32), axis=(1, 2))
    mx = jnp.max(x, axis=(1, 2)).astype(jnp.float32)
    v = jnp.concatenate([avg, mx], axis=0)                      # (2B, C)
    h = dense(v, p_fc1, act="relu", out_dtype=jnp.float32)
    o = dense(h, p_fc2, act="none", out_dtype=jnp.float32)
    return jax.nn.sigmoid(o[:B] + o[B:])


def cmwr_module(P, rgb, depth, rgbd):
    # TODO(synk): original cmWR code unavailable; softmax modality weighting + residual.
    B, H, W, C = rgb.shape
    wl, bias = P["cmwr"]
    R = B * H * W
    r2, d2, rd2 = (t.reshape(R, C) for t in (rgb, depth, rgbd))
    orr, odd, ordd = cmwr_fuse(r2, d2, rd2, wl, bias)
    rs = lambda t: t.reshape(B, H, W, C)
    return rs(orr), rs(odd), rs(ordd)


# ----------------------------------------------------------------------------
# Parameters (deterministic synthetic init, BN folded, bf16, pre-padded/split)
# ----------------------------------------------------------------------------
class ParamGen:
    def __init__(self, seed=0):
        self.key = jax.random.PRNGKey(seed)
        self.count = 0

    def _draw(self, fan_in, cout):
        self.count += 1
        k = jax.random.fold_in(self.key, self.count)
        return jax.random.normal(k, (fan_in, cout), jnp.float32) * (1.0 / math.sqrt(fan_in))

    def conv_mm(self, kh, kw, cin, cout):
        """fused_matmul format: pre-padded bf16 (Kp, Np) + f32 (1, Np) bias."""
        K, N = kh * kw * cin, cout
        w = self._draw(K, N)
        Kp, Np = _ru(K, 128), _ru(N, 128)
        w_pad = jnp.pad(w, ((0, Kp - K), (0, Np - N))).astype(jnp.bfloat16)
        b_pad = jnp.zeros((1, Np), jnp.float32)
        return (w_pad, b_pad, kh, kw, N)

    def conv_s1(self, k, cins, cout):
        """halo-conv format: per-input (k*k*C_i, Np) bf16 (pos-major rows)."""
        cins = tuple(cins)
        K = k * k * sum(cins)
        w = self._draw(K, cout).reshape(k * k, sum(cins), cout)
        Np = _ru(cout, 128)
        w_list = []
        off = 0
        for c in cins:
            wi = w[:, off:off + c, :].reshape(k * k * c, cout)
            w_list.append(jnp.pad(wi, ((0, 0), (0, Np - cout))).astype(jnp.bfloat16))
            off += c
        b_pad = jnp.zeros((1, Np), jnp.float32)
        return (tuple(w_list), b_pad, k, cout)

    def raw(self, kh, kw, cin, cout):
        return self._draw(kh * kw * cin, cout), jnp.zeros((cout,), jnp.float32)


def make_resnet50_params(pg):
    p = {"stem": pg.conv_mm(7, 7, 3, 64)}
    layers = [(64, 3), (128, 4), (256, 6), (512, 3)]
    inplanes = 64
    for li, (planes, blocks) in enumerate(layers):
        for bi in range(blocks):
            stride = 2 if (li > 0 and bi == 0) else 1
            blk = {"c1": pg.conv_mm(1, 1, inplanes, planes),
                   "c3": pg.conv_mm(1, 1, planes, planes * 4)}
            if stride == 1:
                blk["c2"] = ("s1", pg.conv_s1(3, (planes,), planes))
            else:
                blk["c2"] = ("mm", pg.conv_mm(3, 3, planes, planes))
            if bi == 0:
                blk["ds"] = pg.conv_mm(1, 1, inplanes, planes * 4)
            p[f"l{li}b{bi}"] = blk
            inplanes = planes * 4
    return p


def build_params(seed=0):
    pg = ParamGen(seed)
    P = {"rgb_bb": make_resnet50_params(pg), "depth_bb": make_resnet50_params(pg)}
    res_ch = [64, 256, 512, 1024, 2048]
    ch = [64, 128, 256, 512, 512]
    for i in range(5):
        P[f"re{i+1}_r"] = pg.conv_mm(1, 1, res_ch[i], ch[i])
        P[f"re{i+1}_d"] = pg.conv_mm(1, 1, res_ch[i], ch[i])
    P["conv1"] = pg.conv_mm(1, 1, 2 * ch[2], ch[2])
    P["conv2"] = pg.conv_mm(1, 1, 2 * ch[3], ch[3])
    P["conv3"] = pg.conv_mm(1, 1, 2 * ch[4], ch[4])
    for name in ["sa1", "sa2", "sa_rgb", "sa_depth", "sa_rgbd"]:
        P[name] = pg.conv_mm(7, 7, 2, 1)
    for name in ["ca_rgb", "ca_depth", "ca_rgbd"]:
        P[name + "_fc1"] = pg.conv_mm(1, 1, ch[4], ch[4] // 16)
        P[name + "_fc2"] = pg.conv_mm(1, 1, ch[4] // 16, ch[4])
    # cmWR modality-weighting conv stored as (3C, 128) with logits in lanes 0..2.
    w_cm, b_cm = pg.raw(1, 1, 3 * ch[4], 3)
    wl = jnp.zeros((3 * ch[4], 128), jnp.float32).at[:, :3].set(w_cm)
    bl = jnp.zeros((1, 128), jnp.float32).at[:, :3].set(b_cm.reshape(1, 3))
    P["cmwr"] = (wl.astype(jnp.bfloat16), bl)
    for name in ["conv_rgb", "conv_depth", "conv_rgbd"]:
        P[name] = pg.conv_s1(3, (ch[4],), ch[4])
    for br in ["rgb", "depth", "rgbd"]:
        c_prev = ch[4]
        for lvl in range(4, -1, -1):
            P[f"dec_{br}_{lvl}"] = pg.conv_s1(3, (c_prev, ch[lvl]), ch[lvl])
            c_prev = ch[lvl]
        P[f"dec_{br}_pred"] = pg.conv_s1(3, (ch[0],), 1)
    return P


# ----------------------------------------------------------------------------
# ResNet-50 backbone (5 stages, matching Backbone_ResNet50's split)
# ----------------------------------------------------------------------------
def bottleneck(x, blk, stride):
    out = conv_mm(x, blk["c1"], act="relu")
    tag, c2p = blk["c2"]
    if tag == "s1":
        out = conv3x3_s1([out], c2p, act="relu")
    else:
        out = conv_mm(out, c2p, stride=stride, pad=1, act="relu")
    if "ds" in blk:
        idt = conv_mm(x, blk["ds"], stride=stride, act="none")
    else:
        idt = x
    # c3 conv + BN + residual add + relu fused into a single matmul epilogue.
    return conv_mm(out, blk["c3"], act="relu", residual=idt)


def resnet_layer(x, bp, li, nblocks):
    stride = 1 if li == 0 else 2
    for bi in range(nblocks):
        x = bottleneck(x, bp[f"l{li}b{bi}"], stride if bi == 0 else 1)
    return x


def backbone_stages(x, bp):
    c1 = conv_mm(x, bp["stem"], stride=2, pad=3, act="relu")  # block1: conv+bn+relu
    c2 = resnet_layer(maxpool3x3s2(c1), bp, 0, 3)             # block2: maxpool+layer1
    c3 = resnet_layer(c2, bp, 1, 4)                            # block3: layer2
    c4 = resnet_layer(c3, bp, 2, 6)                            # block4: layer3
    c5 = resnet_layer(c4, bp, 3, 3)                            # block5: layer4
    return c1, c2, c3, c4, c5


# ----------------------------------------------------------------------------
# Decoder (progressive top-down; original Decoder definition not provided)
# ----------------------------------------------------------------------------
def decoder_branch(P, br, feat, encs):
    # TODO(synk): simple cat+conv3x3+upsample decoder standing in for the original IRD.
    f = feat
    for lvl in range(4, -1, -1):
        e = encs[lvl]
        if f.shape[1] != e.shape[1] or f.shape[2] != e.shape[2]:
            f = bilinear_resize(f, e.shape[1], e.shape[2])
        # conv3x3 over cat(f, e) without materializing the concat in HBM
        f = conv3x3_s1([f, e], P[f"dec_{br}_{lvl}"], act="relu")
    m = conv3x3_s1([f], P[f"dec_{br}_pred"], act="none")
    return bilinear_resize(m, 2 * m.shape[1], 2 * m.shape[2])


# ----------------------------------------------------------------------------
# CIRNet_R50 forward
# ----------------------------------------------------------------------------
def cirnet_forward(P, rgb_nchw, depth_nchw):
    rgb = jnp.transpose(rgb_nchw, (0, 2, 3, 1)).astype(ACT_DTYPE)
    depth = jnp.transpose(depth_nchw, (0, 2, 3, 1)).astype(ACT_DTYPE)
    depth = jnp.concatenate([depth, depth, depth], axis=-1)

    r1, r2, r3, r4, r5 = backbone_stages(rgb, P["rgb_bb"])
    d1, d2, d3, d4, d5 = backbone_stages(depth, P["depth_bb"])

    conv1_r = conv_mm(r1, P["re1_r"], act="relu")
    conv1_d = conv_mm(d1, P["re1_d"], act="relu")
    conv2_r = conv_mm(r2, P["re2_r"], act="relu")
    conv2_d = conv_mm(d2, P["re2_d"], act="relu")
    conv3_r = conv_mm(r3, P["re3_r"], act="relu")
    conv3_d = conv_mm(d3, P["re3_d"], act="relu")

    # conv1(cat(conv3_r, conv3_d)) without materializing the concat
    conv3_rgbd = conv1x1_multi([conv3_r, conv3_d], P["conv1"], act="relu")
    conv3_rgbd = bilinear_resize(conv3_rgbd, conv3_rgbd.shape[1] // 2,
                                 conv3_rgbd.shape[2] // 2)
    conv3_rgbd_map = spatial_attention(conv3_rgbd, P["sa1"])

    conv4_r = conv_mm(r4, P["re4_r"], act="relu")
    conv4_d = conv_mm(d4, P["re4_d"], act="relu")
    # conv2(cat) with the x*map+x residual gate fused into the matmul epilogue
    conv4_rgbd = conv1x1_multi([conv4_r, conv4_d], P["conv2"], act="relu",
                               gate=conv3_rgbd_map)
    conv4_rgbd = bilinear_resize(conv4_rgbd, conv4_rgbd.shape[1] // 2,
                                 conv4_rgbd.shape[2] // 2)
    conv4_rgbd_map = spatial_attention(conv4_rgbd, P["sa2"])

    conv5_r = conv_mm(r5, P["re5_r"], act="relu")
    conv5_d = conv_mm(d5, P["re5_d"], act="relu")
    conv5_rgbd = conv1x1_multi([conv5_r, conv5_d], P["conv3"], act="relu",
                               gate=conv4_rgbd_map)

    B, Hc, Wc, C = conv5_r.shape
    Psp = Hc * Wc

    def smar(x, ca_p, sa_p):
        sa_map = spatial_attention(x, sa_p)                     # (B,H,W,1)
        ca_vec = channel_attention(x, *ca_p)                    # (B,C) f32
        fused = smar_fuse(x.reshape(B, Psp, C),
                          ca_vec.reshape(B, 1, C),
                          sa_map.reshape(B, Psp, 1))
        return fused.reshape(B, Hc, Wc, C)

    rgb_smAR = conv3x3_s1([smar(conv5_r, (P["ca_rgb_fc1"], P["ca_rgb_fc2"]), P["sa_rgb"])],
                          P["conv_rgb"], act="relu")
    depth_smAR = conv3x3_s1([smar(conv5_d, (P["ca_depth_fc1"], P["ca_depth_fc2"]), P["sa_depth"])],
                            P["conv_depth"], act="relu")
    rgbd_smAR = conv3x3_s1([smar(conv5_rgbd, (P["ca_rgbd_fc1"], P["ca_rgbd_fc2"]), P["sa_rgbd"])],
                           P["conv_rgbd"], act="relu")

    rgb_cmWR, depth_cmWR, rgbd_cmWR = cmwr_module(P, rgb_smAR, depth_smAR, rgbd_smAR)

    rgb_list = [conv1_r, conv2_r, conv3_r, conv4_r, conv5_r]
    depth_list = [conv1_d, conv2_d, conv3_d, conv4_d, conv5_d]

    rgb_map = decoder_branch(P, "rgb", rgb_cmWR, rgb_list)
    depth_map = decoder_branch(P, "depth", depth_cmWR, depth_list)
    avg_encs = [((a.astype(jnp.float32) + b.astype(jnp.float32)) * 0.5).astype(ACT_DTYPE)
                for a, b in zip(rgb_list, depth_list)]
    rgbd_map = decoder_branch(P, "rgbd", rgbd_cmWR, avg_encs)

    to_nchw = lambda t: jnp.transpose(t.astype(jnp.float32), (0, 3, 1, 2))
    return to_nchw(rgb_map), to_nchw(depth_map), to_nchw(rgbd_map)


# ----------------------------------------------------------------------------
if __name__ == "__main__":
    key = jax.random.PRNGKey(0)
    k1, k2 = jax.random.split(key)
    # SMALL shapes: batch=2, 64x64 input (smallest that keeps the 1/32 stage >= 2x2).
    rgb = jax.random.normal(k1, (2, 3, 64, 64), jnp.float32)
    depth = jax.random.normal(k2, (2, 1, 64, 64), jnp.float32)

    params = build_params(seed=0)
    rgb_map, depth_map, rgbd_map = cirnet_forward(params, rgb, depth)
    jax.block_until_ready((rgb_map, depth_map, rgbd_map))

    assert rgb_map.shape == (2, 1, 64, 64)
    assert depth_map.shape == (2, 1, 64, 64)
    assert rgbd_map.shape == (2, 1, 64, 64)
    assert all(bool(jnp.all(jnp.isfinite(m))) for m in (rgb_map, depth_map, rgbd_map))
    print("KERNEL_OK")
</pallas_src>

<mosaic_0001>
module attributes {stable_mosaic.version = 11 : i64} {
  func.func @kernel(%arg0: i32, %arg1: i32, %arg2: i32, %arg3: memref<512x256xbf16, #tpu.memory_space<vmem>>, %arg4: memref<256x128xbf16, #tpu.memory_space<vmem>>, %arg5: memref<1x128xf32, #tpu.memory_space<vmem>>, %arg6: memref<512x128xbf16, #tpu.memory_space<vmem>>, %arg7: memref<512x128xf32, #tpu.memory_space<vmem>>) attributes {dimension_semantics = [#tpu.dimension_semantics<parallel>, #tpu.dimension_semantics<parallel>, #tpu.dimension_semantics<arbitrary>], iteration_bounds = array<i64: 4, 1, 1>, scalar_prefetch = 0 : i64, scratch_operands = 1 : i64, tpu.core_type = #tpu.core_type<tc>, window_params = [{transform_indices = @transform_0, window_bounds = array<i64: 512, 256>}, {transform_indices = @transform_1, window_bounds = array<i64: 256, 128>}, {transform_indices = @transform_2, window_bounds = array<i64: 1, 128>}, {transform_indices = @transform_3, window_bounds = array<i64: 512, 128>}]} {
    %c0_i32 = arith.constant 0 : i32
    %0 = arith.cmpi eq, %arg2, %c0_i32 : i32
    %1 = arith.extui %0 : i1 to i32
    %c0_i32_0 = arith.constant 0 : i32
    %2 = arith.cmpi ne, %1, %c0_i32_0 : i32
    scf.if %2 {
      %cst_10 = arith.constant 0.000000e+00 : f32
      %12 = vector.broadcast %cst_10 : f32 to vector<512x128xf32>
      %c0_11 = arith.constant 0 : index
      %c0_12 = arith.constant 0 : index
      %13 = vector.load %arg7[%c0_11, %c0_12] : memref<512x128xf32, #tpu.memory_space<vmem>>, vector<512x128xf32>
      tpu.vector_store %arg7[%c0_11, %c0_12], %12 {strides = array<i32>} : memref<512x128xf32, #tpu.memory_space<vmem>>, vector<512x128xf32>,
    } else {
    }
    %c0 = arith.constant 0 : index
    %c0_1 = arith.constant 0 : index
    %3 = vector.load %arg7[%c0, %c0_1] : memref<512x128xf32, #tpu.memory_space<vmem>>, vector<512x128xf32>
    %c0_2 = arith.constant 0 : index
    %c0_3 = arith.constant 0 : index
    %4 = vector.load %arg3[%c0_2, %c0_3] : memref<512x256xbf16, #tpu.memory_space<vmem>>, vector<512x256xbf16>
    %c0_4 = arith.constant 0 : index
    %c0_5 = arith.constant 0 : index
    %5 = vector.load %arg4[%c0_4, %c0_5] : memref<256x128xbf16, #tpu.memory_space<vmem>>, vector<256x128xbf16>
    %cst = arith.constant dense<0.000000e+00> : vector<512x128xf32>
    %6 = tpu.matmul %4, %5, %cst {dimension_numbers = #tpu.dot_dimension_numbers<[1], [0], [0], [1], [0, 0, 1, 1], [], []>} : vector<512x256xbf16>, vector<256x128xbf16>, vector<512x128xf32> -> vector<512x128xf32>
    %7 = arith.addf %3, %6 : vector<512x128xf32>
    %c0_6 = arith.constant 0 : index
    %c0_7 = arith.constant 0 : index
    %8 = vector.load %arg7[%c0_6, %c0_7] : memref<512x128xf32, #tpu.memory_space<vmem>>, vector<512x128xf32>
    tpu.vector_store %arg7[%c0_6, %c0_7], %7 {strides = array<i32>} : memref<512x128xf32, #tpu.memory_space<vmem>>, vector<512x128xf32>,
    %c0_i32_8 = arith.constant 0 : i32
    %9 = arith.cmpi eq, %arg2, %c0_i32_8 : i32
    %10 = arith.extui %9 : i1 to i32
    %c0_i32_9 = arith.constant 0 : i32
    %11 = arith.cmpi ne, %10, %c0_i32_9 : i32
    scf.if %11 {
      %c0_10 = arith.constant 0 : index
      %c0_11 = arith.constant 0 : index
      %12 = vector.load %arg7[%c0_10, %c0_11] : memref<512x128xf32, #tpu.memory_space<vmem>>, vector<512x128xf32>
      %c0_12 = arith.constant 0 : index
      %c0_13 = arith.constant 0 : index
      %13 = vector.load %arg5[%c0_12, %c0_13] : memref<1x128xf32, #tpu.memory_space<vmem>>, vector<1x128xf32>
      %14 = vector.broadcast %13 : vector<1x128xf32> to vector<512x128xf32>
      %15 = arith.addf %12, %14 : vector<512x128xf32>
      %cst_14 = arith.constant 0.000000e+00 : f32
      %16 = vector.broadcast %cst_14 : f32 to vector<512x128xf32>
      %17 = arith.maximumf %15, %16 : vector<512x128xf32>
      %18 = arith.truncf %17 : vector<512x128xf32> to vector<512x128xbf16>
      %c0_15 = arith.constant 0 : index
      %c0_16 = arith.constant 0 : index
      %19 = vector.load %arg6[%c0_15, %c0_16] : memref<512x128xbf16, #tpu.memory_space<vmem>>, vector<512x128xbf16>
      tpu.vector_store %arg6[%c0_15, %c0_16], %18 {strides = array<i32>} : memref<512x128xbf16, #tpu.memory_space<vmem>>, vector<512x128xbf16>,
    } else {
    }
    return
  }
  func.func @transform_0(%arg0: i32, %arg1: i32, %arg2: i32) -> (i32, i32) {
    %c0_i32 = arith.constant 0 : i32
    return %arg0, %arg2 : i32, i32
  }
  func.func @transform_1(%arg0: i32, %arg1: i32, %arg2: i32) -> (i32, i32) {
    %c0_i32 = arith.constant 0 : i32
    return %arg2, %arg1 : i32, i32
  }
  func.func @transform_2(%arg0: i32, %arg1: i32, %arg2: i32) -> (i32, i32) {
    %c0_i32 = arith.constant 0 : i32
    %c0_i32_0 = arith.constant 0 : i32
    return %c0_i32, %arg1 : i32, i32
  }
  func.func @transform_3(%arg0: i32, %arg1: i32, %arg2: i32) -> (i32, i32) {
    %c0_i32 = arith.constant 0 : i32
    return %arg0, %arg1 : i32, i32
  }
}

</mosaic_0001>

<llo_original>
// kernel: fused_matmul.1
$region0: #{fused_matmul.1}
  #allocation0 [shape = 'u32[]', space=smem, size = 0x4, offset = 0x4, fixed_abs, tag = 'smem constant byte address 0x4 - core index']
  #allocation1 [shape = 'u32[144,128]{1,0:T(1,128)}', space=vmem, size = 0x12000, scoped, tag = 'internal scratch']
  #allocation2 [shape = 'f32[512,128]{1,0:T(8,128)}', space=vmem, size = 0x40000, scoped, tag = 'scratch operand']
  %s0 = inlined_call_operand.vmem [shape: bf16[2048,256], index: 0, kind: input, shape index: {}]
  %s1 = inlined_call_operand.vmem [shape: bf16[256,128], index: 1, kind: input, shape index: {}]
  %s2 = inlined_call_operand.vmem [shape: f32[1,128], index: 2, kind: input, shape index: {}]
  %s3 = inlined_call_operand.vmem [shape: bf16[2048,128], index: 3, kind: output, shape index: {}]
  %s4 = sld [smem:[#allocation0]]
  $region53: #{fused_matmul.1} parent=0
    _
  %s6 = ssub.s32 1, %s4
  %s7 = scalar_select 0, %s6, %s4
  loop: start=0, step=1, limit=6
  $region2: #{fused_matmul.1} parent=0 // loop_pre_header
    _
  $region3: #{fused_matmul.1} parent=0 // loop_header
    %s9 = sphi 0, %s13
    %p10 = scmp.ge.s32.totalorder %s9, 6
    %s16 = sphi 0, %s35
    %s17 = sphi 0, %s31
    %s18 = sphi 0, %s27
    %s19 = sphi 0, %s16
    %s20 = sphi 0, %s17
    %s21 = sphi 0, %s18
    %s22 = sphi 0, %s19
    %s23 = sphi 0, %s20
    %s24 = sphi 0, %s21
    %s40 = sphi 0, %s42
    %s43 = sphi 0, %s40
    %s44 = sphi 0, %s43
    %s60 = sphi 0, %s44
    %s68 = sphi 0, %s70
    %s71 = sphi 0, %s68
    %s72 = sphi 0, %s71
    %s88 = sphi 0, %s72
    %s94 = sphi 0, %s96
    %s97 = sphi 0, %s94
    %s98 = sphi 0, %s97
    %s114 = sphi 0, %s98
    %s122 = sphi 0, %s124
    %s125 = sphi 0, %s122
    %s126 = sphi 0, %s125
    %s142 = sphi 0, %s126
  $region4: #{fused_matmul.1} parent=0 // loop_header_branch
    %12 = sbr.rel (%p10) target = $region8
  $region5: #{fused_matmul.1} parent=0 // loop_body
    %s14 = ssub.s32 %s9, 1
    %s15 = ssub.s32 %s9, 2
    %s25 = sadd.s32 1, %s18
    %p26 = scmp.ge.s32.totalorder %s25, 1
    %s27 = scalar_select %p26, 0, %s25
    %s28 = sadd.s32 1, %s17
    %s29 = scalar_select %p26, %s28, %s17
    %p30 = scmp.ge.s32.totalorder %s29, 1
    %s31 = scalar_select %p30, 0, %s29
    %s32 = sadd.s32 1, %s16
    %s33 = scalar_select %p30, %s32, %s16
    %p34 = scmp.ge.s32.totalorder %s33, 4
    %s35 = scalar_select %p34, 0, %s33
    %s36 = ssub.s32 %s16, %s35
    %s37 = ssub.s32 %s18, %s27
    %s38 = sor.u32 %s36, %s37
    %p39 = scmp.eq.s32.totalorder %s38, 0
    %s41 = sadd.s32 %s40, 1
    %s42 = scalar_select %p39, %s40, %s41
    %p45 = pneg %p39
    %p46 = scmp.eq.s32.totalorder %s9, 3
    %p47 = por %p45, %p46
    %p48 = scmp.ne.s32.totalorder %s40, %s43
    %p49 = scmp.eq.s32.totalorder %s9, 0
    %p50 = por %p48, %p49
    %p51 = scmp.ne.s32.totalorder %s40, %s43
    %p52 = scmp.eq.s32.totalorder %s14, 3
    %p53 = por %p51, %p52
    %p54 = scmp.ne.s32.totalorder %s43, %s44
    %p55 = scmp.eq.s32.totalorder %s14, 0
    %p56 = por %p54, %p55
    %p57 = scmp.ne.s32.totalorder %s43, %s44
    %p58 = scmp.eq.s32.totalorder %s15, 3
    %p59 = por %p57, %p58
    %p61 = scmp.ne.s32.totalorder %s44, %s60
    %p62 = scmp.eq.s32.totalorder %s15, 0
    %p63 = por %p61, %p62
    %s64 = ssub.s32 %s18, %s27
    %s65 = ssub.s32 %s17, %s31
    %s66 = sor.u32 %s64, %s65
    %p67 = scmp.eq.s32.totalorder %s66, 0
    %s69 = sadd.s32 %s68, 1
    %s70 = scalar_select %p67, %s68, %s69
    %p73 = pneg %p67
    %p74 = scmp.eq.s32.totalorder %s9, 3
    %p75 = por %p73, %p74
    %p76 = scmp.ne.s32.totalorder %s68, %s71
    %p77 = scmp.eq.s32.totalorder %s9, 0
    %p78 = por %p76, %p77
    %p79 = scmp.ne.s32.totalorder %s68, %s71
    %p80 = scmp.eq.s32.totalorder %s14, 3
    %p81 = por %p79, %p80
    %p82 = scmp.ne.s32.totalorder %s71, %s72
    %p83 = scmp.eq.s32.totalorder %s14, 0
    %p84 = por %p82, %p83
    %p85 = scmp.ne.s32.totalorder %s71, %s72
    %p86 = scmp.eq.s32.totalorder %s15, 3
    %p87 = por %p85, %p86
    %p89 = scmp.ne.s32.totalorder %s72, %s88
    %p90 = scmp.eq.s32.totalorder %s15, 0
    %p91 = por %p89, %p90
    %s92 = ssub.s32 %s17, %s31
    %p93 = scmp.eq.s32.totalorder %s92, 0
    %s95 = sadd.s32 %s94, 1
    %s96 = scalar_select %p93, %s94, %s95
    %p99 = pneg %p93
    %p100 = scmp.eq.s32.totalorder %s9, 3
    %p101 = por %p99, %p100
    %p102 = scmp.ne.s32.totalorder %s94, %s97
    %p103 = scmp.eq.s32.totalorder %s9, 0
    %p104 = por %p102, %p103
    %p105 = scmp.ne.s32.totalorder %s94, %s97
    %p106 = scmp.eq.s32.totalorder %s14, 3
    %p107 = por %p105, %p106
    %p108 = scmp.ne.s32.totalorder %s97, %s98
    %p109 = scmp.eq.s32.totalorder %s14, 0
    %p110 = por %p108, %p109
    %p111 = scmp.ne.s32.totalorder %s97, %s98
    %p112 = scmp.eq.s32.totalorder %s15, 3
    %p113 = por %p111, %p112
    %p115 = scmp.ne.s32.totalorder %s98, %s114
    %p116 = scmp.eq.s32.totalorder %s15, 0
    %p117 = por %p115, %p116
    %s118 = ssub.s32 %s16, %s35
    %s119 = ssub.s32 %s17, %s31
    %s120 = sor.u32 %s118, %s119
    %p121 = scmp.eq.s32.totalorder %s120, 0
    %s123 = sadd.s32 %s122, 1
    %s124 = scalar_select %p121, %s122, %s123
    %p127 = pneg %p121
    %p128 = scmp.eq.s32.totalorder %s9, 3
    %p129 = por %p127, %p128
    %p130 = scmp.ne.s32.totalorder %s122, %s125
    %p131 = scmp.eq.s32.totalorder %s9, 0
    %p132 = por %p130, %p131
    %p133 = scmp.ne.s32.totalorder %s122, %s125
    %p134 = scmp.eq.s32.totalorder %s14, 3
    %p135 = por %p133, %p134
    %p136 = scmp.ne.s32.totalorder %s125, %s126
    %p137 = scmp.eq.s32.totalorder %s14, 0
    %p138 = por %p136, %p137
    %p139 = scmp.ne.s32.totalorder %s125, %s126
    %p140 = scmp.eq.s32.totalorder %s15, 3
    %p141 = por %p139, %p140
    %p143 = scmp.ne.s32.totalorder %s126, %s142
    %p144 = scmp.eq.s32.totalorder %s15, 0
    %p145 = por %p143, %p144
    %p146 = scmp.le.s32.totalorder 1, %s9
    %p147 = scmp.lt.s32.totalorder %s9, 5
    %p148 = pnand %p146, %p147
    %p149 = pneg %p148
    // Predicated region
    $region9: #{fused_matmul.1} parent=5 // pred_check
      _
    $region10: #{fused_matmul.1} parent=5 // pred_check_branch
      %151 = sbr.rel (%p148) target = $region12
    $region11: #{fused_matmul.1} parent=5 // pred_region
      %s152 = ssub.s32 %s9, 1
      // Predicated region
      $region13: #{fused_matmul.1} parent=11 // pred_check
        %p153 = pneg %p84
      $region14: #{fused_matmul.1} parent=11 // pred_check_branch
        %155 = sbr.rel (%p153) target = $region16
      $region15: #{fused_matmul.1} parent=11 // pred_region
        %s156 = smul.u32 32, %s21
        %p157 = scmp.lt.s32.totalorder %s156, 31
        %s158 = scalar_select %p157, %s156, 31
        %p159 = scmp.lt.s32.totalorder %s20, 0
        %s160 = scalar_select %p159, %s20, 0
        %s161 = sadd.s32 %s160, %s158
        %s162 = smul.addr %s161, 4
        %s163 = scalar_lea.vmem %s1, %s162
        %s164 = smul.u32 32, %s21
      $region16: #{fused_matmul.1} parent=11 // pred_fallthru
        _
      // Predicated region
      $region17: #{fused_matmul.1} parent=11 // pred_check
        %p165 = pneg %p110
      $region18: #{fused_matmul.1} parent=11 // pred_check_branch
        %167 = sbr.rel (%p165) target = $region20
      $region19: #{fused_matmul.1} parent=11 // pred_region
        %p168 = scmp.lt.s32.totalorder %s20, 0
        %s169 = scalar_select %p168, %s20, 0
        %s170 = scalar_lea.vmem %s2, %s169
      $region20: #{fused_matmul.1} parent=11 // pred_fallthru
        _
    $region12: #{fused_matmul.1} parent=5 // pred_fallthru
      _
    %p171 = scmp.lt.s32.totalorder %s9, 4
    // Predicated region
    $region21: #{fused_matmul.1} parent=5 // pred_check
      %p172 = pneg %p171
    $region22: #{fused_matmul.1} parent=5 // pred_check_branch
      %174 = sbr.rel (%p172) target = $region24
    $region23: #{fused_matmul.1} parent=5 // pred_region
      // Predicated region
      $region25: #{fused_matmul.1} parent=23 // pred_check
        %p175 = pneg %p50
      $region26: #{fused_matmul.1} parent=23 // pred_check_branch
        %177 = sbr.rel (%p175) target = $region28
      $region27: #{fused_matmul.1} parent=23 // pred_region
        %s178 = smul.u32 64, %s16
        %s179 = smul.u32 2, %s18
        %p180 = scmp.lt.s32.totalorder %s178, 255
        %s181 = scalar_select %p180, %s178, 255
        %p182 = scmp.lt.s32.totalorder %s179, 1
        %s183 = scalar_select %p182, %s179, 1
        %s184 = smul.addr %s181, 2
        %s185 = sadd.s32 %s183, %s184
        %s186 = smul.addr %s185, 4
        %s187 = scalar_lea.vmem %s0, %s186
        %s188 = smul.u32 64, %s16
        %s189 = smul.u32 2, %s18
      $region28: #{fused_matmul.1} parent=23 // pred_fallthru
        _
    $region24: #{fused_matmul.1} parent=5 // pred_fallthru
      _
    %p190 = scmp.le.s32.totalorder 1, %s9
    %p191 = scmp.lt.s32.totalorder %s9, 5
    %p192 = pnand %p190, %p191
    %p193 = pneg %p192
    // Predicated region
    $region29: #{fused_matmul.1} parent=5 // pred_check
      _
    $region30: #{fused_matmul.1} parent=5 // pred_check_branch
      %195 = sbr.rel (%p192) target = $region32
    $region31: #{fused_matmul.1} parent=5 // pred_region
      %s196 = ssub.s32 %s9, 1
      %s197 = smul.u32 64, %s19
      %s198 = smul.u32 2, %s21
      %p199 = scmp.lt.s32.totalorder %s197, 255
      %s200 = scalar_select %p199, %s197, 255
      %p201 = scmp.lt.s32.totalorder %s198, 1
      %s202 = scalar_select %p201, %s198, 1
      %s203 = smul.addr %s200, 2
      %s204 = sadd.s32 %s202, %s203
      %s205 = smul.addr %s204, 4
      %s206 = scalar_lea.vmem %s0, %s205
      %p207 = pneg %p56
      %p208 = pneg %p53
      %s209 = smul.u32 32, %s21
      %p210 = scmp.lt.s32.totalorder %s209, 31
      %s211 = scalar_select %p210, %s209, 31
      %p212 = scmp.lt.s32.totalorder %s20, 0
      %s213 = scalar_select %p212, %s20, 0
      %s214 = sadd.s32 %s213, %s211
      %s215 = smul.addr %s214, 4
      %s216 = scalar_lea.vmem %s1, %s215
      %p217 = pneg %p84
      %p218 = pneg %p81
      %p219 = scmp.lt.s32.totalorder %s20, 0
      %s220 = scalar_select %p219, %s20, 0
      %s221 = scalar_lea.vmem %s2, %s220
      %p222 = pneg %p110
      %p223 = pneg %p107
      %p224 = pneg %p138
      %p225 = pneg %p135
      %s226 = smul.u32 64, %s19
      %p227 = scmp.lt.s32.totalorder %s226, 255
      %s228 = scalar_select %p227, %s226, 255
      %p229 = scmp.lt.s32.totalorder %s20, 0
      %s230 = scalar_select %p229, %s20, 0
      %s231 = sadd.s32 %s230, %s228
      %s232 = smul.addr %s231, 4
      %s233 = scalar_lea.vmem %s3, %s232
      %s234 = smul.u32 64, %s19
      %s235 = smul.u32 2, %s21
      %p236 = scmp.lt.s32.totalorder %s234, 255
      %s237 = scalar_select %p236, %s234, 255
      %p238 = scmp.lt.s32.totalorder %s235, 1
      %s239 = scalar_select %p238, %s235, 1
      %s240 = smul.addr %s237, 2
      %s241 = sadd.s32 %s239, %s240
      %s242 = smul.addr %s241, 4
      %s243 = scalar_lea.vmem %s0, %s242
      %s244 = smul.u32 64, %s19
      %s245 = smul.u32 2, %s21
      %s246 = smul.u32 32, %s21
      %p247 = scmp.lt.s32.totalorder %s246, 31
      %s248 = scalar_select %p247, %s246, 31
      %p249 = scmp.lt.s32.totalorder %s20, 0
      %s250 = scalar_select %p249, %s20, 0
      %s251 = sadd.s32 %s250, %s248
      %s252 = smul.addr %s251, 4
      %s253 = scalar_lea.vmem %s1, %s252
      %s254 = smul.u32 32, %s21
      %p255 = scmp.lt.s32.totalorder %s20, 0
      %s256 = scalar_select %p255, %s20, 0
      %s257 = scalar_lea.vmem %s2, %s256
      %s258 = smul.u32 64, %s19
      %p259 = scmp.lt.s32.totalorder %s258, 255
      %s260 = scalar_select %p259, %s258, 255
      %p261 = scmp.lt.s32.totalorder %s20, 0
      %s262 = scalar_select %p261, %s20, 0
      %s263 = sadd.s32 %s262, %s260
      %s264 = smul.addr %s263, 4
      %s265 = scalar_lea.vmem %s3, %s264
      %s266 = smul.u32 64, %s19
      %p268 = scmp.eq.s32.totalorder %s21, 0
      // Predicated region
      $region33: #{fused_matmul.1} parent=31 // pred_check
        %p269 = pneg %p268
      $region34: #{fused_matmul.1} parent=31 // pred_check_branch
        %271 = sbr.rel (%p269) target = $region36
      $region35: #{fused_matmul.1} parent=31 // pred_region
        %272 = vst [vmem:[#allocation2] sm:$0xff] 0.0
        %273 = vst [vmem:[#allocation2 + $0x8] sm:$0xff] 0.0
        %274 = vst [vmem:[#allocation2 + $0x10] sm:$0xff] 0.0
        %275 = vst [vmem:[#allocation2 + $0x18] sm:$0xff] 0.0
        %276 = vst [vmem:[#allocation2 + $0x20] sm:$0xff] 0.0
        %277 = vst [vmem:[#allocation2 + $0x28] sm:$0xff] 0.0
        %278 = vst [vmem:[#allocation2 + $0x30] sm:$0xff] 0.0
        %279 = vst [vmem:[#allocation2 + $0x38] sm:$0xff] 0.0
        %280 = vst [vmem:[#allocation2 + $0x40] sm:$0xff] 0.0
        %281 = vst [vmem:[#allocation2 + $0x48] sm:$0xff] 0.0
        %282 = vst [vmem:[#allocation2 + $0x50] sm:$0xff] 0.0
        %283 = vst [vmem:[#allocation2 + $0x58] sm:$0xff] 0.0
        %284 = vst [vmem:[#allocation2 + $0x60] sm:$0xff] 0.0
        %285 = vst [vmem:[#allocation2 + $0x68] sm:$0xff] 0.0
        %286 = vst [vmem:[#allocation2 + $0x70] sm:$0xff] 0.0
        %287 = vst [vmem:[#allocation2 + $0x78] sm:$0xff] 0.0
        %288 = vst [vmem:[#allocation2 + $0x80] sm:$0xff] 0.0
        %289 = vst [vmem:[#allocation2 + $0x88] sm:$0xff] 0.0
        %290 = vst [vmem:[#allocation2 + $0x90] sm:$0xff] 0.0
        %291 = vst [vmem:[#allocation2 + $0x98] sm:$0xff] 0.0
        %292 = vst [vmem:[#allocation2 + $0xa0] sm:$0xff] 0.0
        %293 = vst [vmem:[#allocation2 + $0xa8] sm:$0xff] 0.0
        %294 = vst [vmem:[#allocation2 + $0xb0] sm:$0xff] 0.0
        %295 = vst [vmem:[#allocation2 + $0xb8] sm:$0xff] 0.0
        %296 = vst [vmem:[#allocation2 + $0xc0] sm:$0xff] 0.0
        %297 = vst [vmem:[#allocation2 + $0xc8] sm:$0xff] 0.0
        %298 = vst [vmem:[#allocation2 + $0xd0] sm:$0xff] 0.0
        %299 = vst [vmem:[#allocation2 + $0xd8] sm:$0xff] 0.0
        %300 = vst [vmem:[#allocation2 + $0xe0] sm:$0xff] 0.0
        %301 = vst [vmem:[#allocation2 + $0xe8] sm:$0xff] 0.0
        %302 = vst [vmem:[#allocation2 + $0xf0] sm:$0xff] 0.0
        %303 = vst [vmem:[#allocation2 + $0xf8] sm:$0xff] 0.0
        %304 = vst [vmem:[#allocation2 + $0x100] sm:$0xff] 0.0
        %305 = vst [vmem:[#allocation2 + $0x108] sm:$0xff] 0.0
        %306 = vst [vmem:[#allocation2 + $0x110] sm:$0xff] 0.0
        %307 = vst [vmem:[#allocation2 + $0x118] sm:$0xff] 0.0
        %308 = vst [vmem:[#allocation2 + $0x120] sm:$0xff] 0.0
        %309 = vst [vmem:[#allocation2 + $0x128] sm:$0xff] 0.0
        %310 = vst [vmem:[#allocation2 + $0x130] sm:$0xff] 0.0
        %311 = vst [vmem:[#allocation2 + $0x138] sm:$0xff] 0.0
        %312 = vst [vmem:[#allocation2 + $0x140] sm:$0xff] 0.0
        %313 = vst [vmem:[#allocation2 + $0x148] sm:$0xff] 0.0
        %314 = vst [vmem:[#allocation2 + $0x150] sm:$0xff] 0.0
        %315 = vst [vmem:[#allocation2 + $0x158] sm:$0xff] 0.0
        %316 = vst [vmem:[#allocation2 + $0x160] sm:$0xff] 0.0
        %317 = vst [vmem:[#allocation2 + $0x168] sm:$0xff] 0.0
        %318 = vst [vmem:[#allocation2 + $0x170] sm:$0xff] 0.0
        %319 = vst [vmem:[#allocation2 + $0x178] sm:$0xff] 0.0
        %320 = vst [vmem:[#allocation2 + $0x180] sm:$0xff] 0.0
        %321 = vst [vmem:[#allocation2 + $0x188] sm:$0xff] 0.0
        %322 = vst [vmem:[#allocation2 + $0x190] sm:$0xff] 0.0
        %323 = vst [vmem:[#allocation2 + $0x198] sm:$0xff] 0.0
        %324 = vst [vmem:[#allocation2 + $0x1a0] sm:$0xff] 0.0
        %325 = vst [vmem:[#allocation2 + $0x1a8] sm:$0xff] 0.0
        %326 = vst [vmem:[#allocation2 + $0x1b0] sm:$0xff] 0.0
        %327 = vst [vmem:[#allocation2 + $0x1b8] sm:$0xff] 0.0
        %328 = vst [vmem:[#allocation2 + $0x1c0] sm:$0xff] 0.0
        %329 = vst [vmem:[#allocation2 + $0x1c8] sm:$0xff] 0.0
        %330 = vst [vmem:[#allocation2 + $0x1d0] sm:$0xff] 0.0
        %331 = vst [vmem:[#allocation2 + $0x1d8] sm:$0xff] 0.0
        %332 = vst [vmem:[#allocation2 + $0x1e0] sm:$0xff] 0.0
        %333 = vst [vmem:[#allocation2 + $0x1e8] sm:$0xff] 0.0
        %334 = vst [vmem:[#allocation2 + $0x1f0] sm:$0xff] 0.0
        %335 = vst [vmem:[#allocation2 + $0x1f8] sm:$0xff] 0.0
      $region36: #{fused_matmul.1} parent=31 // pred_fallthru
        _
      %v336 = vld [vmem:[#allocation2] sm:$0xff]
      %v337 = vld [vmem:[#allocation2 + $0x8] sm:$0xff]
      %v338 = vld [vmem:[#allocation2 + $0x10] sm:$0xff]
      %v339 = vld [vmem:[#allocation2 + $0x18] sm:$0xff]
      %v340 = vld [vmem:[#allocation2 + $0x20] sm:$0xff]
      %v341 = vld [vmem:[#allocation2 + $0x28] sm:$0xff]
      %v342 = vld [vmem:[#allocation2 + $0x30] sm:$0xff]
      %v343 = vld [vmem:[#allocation2 + $0x38] sm:$0xff]
      %v344 = vld [vmem:[#allocation2 + $0x40] sm:$0xff]
      %v345 = vld [vmem:[#allocation2 + $0x48] sm:$0xff]
      %v346 = vld [vmem:[#allocation2 + $0x50] sm:$0xff]
      %v347 = vld [vmem:[#allocation2 + $0x58] sm:$0xff]
      %v348 = vld [vmem:[#allocation2 + $0x60] sm:$0xff]
      %v349 = vld [vmem:[#allocation2 + $0x68] sm:$0xff]
      %v350 = vld [vmem:[#allocation2 + $0x70] sm:$0xff]
      %v351 = vld [vmem:[#allocation2 + $0x78] sm:$0xff]
      %v352 = vld [vmem:[#allocation2 + $0x80] sm:$0xff]
      %v353 = vld [vmem:[#allocation2 + $0x88] sm:$0xff]
      %v354 = vld [vmem:[#allocation2 + $0x90] sm:$0xff]
      %v355 = vld [vmem:[#allocation2 + $0x98] sm:$0xff]
      %v356 = vld [vmem:[#allocation2 + $0xa0] sm:$0xff]
      %v357 = vld [vmem:[#allocation2 + $0xa8] sm:$0xff]
      %v358 = vld [vmem:[#allocation2 + $0xb0] sm:$0xff]
      %v359 = vld [vmem:[#allocation2 + $0xb8] sm:$0xff]
      %v360 = vld [vmem:[#allocation2 + $0xc0] sm:$0xff]
      %v361 = vld [vmem:[#allocation2 + $0xc8] sm:$0xff]
      %v362 = vld [vmem:[#allocation2 + $0xd0] sm:$0xff]
      %v363 = vld [vmem:[#allocation2 + $0xd8] sm:$0xff]
      %v364 = vld [vmem:[#allocation2 + $0xe0] sm:$0xff]
      %v365 = vld [vmem:[#allocation2 + $0xe8] sm:$0xff]
      %v366 = vld [vmem:[#allocation2 + $0xf0] sm:$0xff]
      %v367 = vld [vmem:[#allocation2 + $0xf8] sm:$0xff]
      %v368 = vld [vmem:[#allocation2 + $0x100] sm:$0xff]
      %v369 = vld [vmem:[#allocation2 + $0x108] sm:$0xff]
      %v370 = vld [vmem:[#allocation2 + $0x110] sm:$0xff]
      %v371 = vld [vmem:[#allocation2 + $0x118] sm:$0xff]
      %v372 = vld [vmem:[#allocation2 + $0x120] sm:$0xff]
      %v373 = vld [vmem:[#allocation2 + $0x128] sm:$0xff]
      %v374 = vld [vmem:[#allocation2 + $0x130] sm:$0xff]
      %v375 = vld [vmem:[#allocation2 + $0x138] sm:$0xff]
      %v376 = vld [vmem:[#allocation2 + $0x140] sm:$0xff]
      %v377 = vld [vmem:[#allocation2 + $0x148] sm:$0xff]
      %v378 = vld [vmem:[#allocation2 + $0x150] sm:$0xff]
      %v379 = vld [vmem:[#allocation2 + $0x158] sm:$0xff]
      %v380 = vld [vmem:[#allocation2 + $0x160] sm:$0xff]
      %v381 = vld [vmem:[#allocation2 + $0x168] sm:$0xff]
      %v382 = vld [vmem:[#allocation2 + $0x170] sm:$0xff]
      %v383 = vld [vmem:[#allocation2 + $0x178] sm:$0xff]
      %v384 = vld [vmem:[#allocation2 + $0x180] sm:$0xff]
      %v385 = vld [vmem:[#allocation2 + $0x188] sm:$0xff]
      %v386 = vld [vmem:[#allocation2 + $0x190] sm:$0xff]
      %v387 = vld [vmem:[#allocation2 + $0x198] sm:$0xff]
      %v388 = vld [vmem:[#allocation2 + $0x1a0] sm:$0xff]
      %v389 = vld [vmem:[#allocation2 + $0x1a8] sm:$0xff]
      %v390 = vld [vmem:[#allocation2 + $0x1b0] sm:$0xff]
      %v391 = vld [vmem:[#allocation2 + $0x1b8] sm:$0xff]
      %v392 = vld [vmem:[#allocation2 + $0x1c0] sm:$0xff]
      %v393 = vld [vmem:[#allocation2 + $0x1c8] sm:$0xff]
      %v394 = vld [vmem:[#allocation2 + $0x1d0] sm:$0xff]
      %v395 = vld [vmem:[#allocation2 + $0x1d8] sm:$0xff]
      %v396 = vld [vmem:[#allocation2 + $0x1e0] sm:$0xff]
      %v397 = vld [vmem:[#allocation2 + $0x1e8] sm:$0xff]
      %v398 = vld [vmem:[#allocation2 + $0x1f0] sm:$0xff]
      %v399 = vld [vmem:[#allocation2 + $0x1f8] sm:$0xff]
      %v400 = vld [vmem:[%s243] sm:$0xff]
      %v401 = vld [vmem:[%s243 + $0x8] sm:$0xff]
      %v402 = vld [vmem:[%s243 + $0x10] sm:$0xff]
      %v403 = vld [vmem:[%s243 + $0x18] sm:$0xff]
      %v404 = vld [vmem:[%s243 + $0x20] sm:$0xff]
      %v405 = vld [vmem:[%s243 + $0x28] sm:$0xff]
      %v406 = vld [vmem:[%s243 + $0x30] sm:$0xff]
      %v407 = vld [vmem:[%s243 + $0x38] sm:$0xff]
      %v408 = vld [vmem:[%s243 + $0x40] sm:$0xff]
      %v409 = vld [vmem:[%s243 + $0x48] sm:$0xff]
      %v410 = vld [vmem:[%s243 + $0x50] sm:$0xff]
      %v411 = vld [vmem:[%s243 + $0x58] sm:$0xff]
      %v412 = vld [vmem:[%s243 + $0x60] sm:$0xff]
      %v413 = vld [vmem:[%s243 + $0x68] sm:$0xff]
      %v414 = vld [vmem:[%s243 + $0x70] sm:$0xff]
      %v415 = vld [vmem:[%s243 + $0x78] sm:$0xff]
      %v416 = vld [vmem:[%s243 + $0x80] sm:$0xff]
      %v417 = vld [vmem:[%s243 + $0x88] sm:$0xff]
      %v418 = vld [vmem:[%s243 + $0x90] sm:$0xff]
      %v419 = vld [vmem:[%s243 + $0x98] sm:$0xff]
      %v420 = vld [vmem:[%s243 + $0xa0] sm:$0xff]
      %v421 = vld [vmem:[%s243 + $0xa8] sm:$0xff]
      %v422 = vld [vmem:[%s243 + $0xb0] sm:$0xff]
      %v423 = vld [vmem:[%s243 + $0xb8] sm:$0xff]
      %v424 = vld [vmem:[%s243 + $0xc0] sm:$0xff]
      %v425 = vld [vmem:[%s243 + $0xc8] sm:$0xff]
      %v426 = vld [vmem:[%s243 + $0xd0] sm:$0xff]
      %v427 = vld [vmem:[%s243 + $0xd8] sm:$0xff]
      %v428 = vld [vmem:[%s243 + $0xe0] sm:$0xff]
      %v429 = vld [vmem:[%s243 + $0xe8] sm:$0xff]
      %v430 = vld [vmem:[%s243 + $0xf0] sm:$0xff]
      %v431 = vld [vmem:[%s243 + $0xf8] sm:$0xff]
      %v432 = vld [vmem:[%s243 + $0x100] sm:$0xff]
      %v433 = vld [vmem:[%s243 + $0x108] sm:$0xff]
      %v434 = vld [vmem:[%s243 + $0x110] sm:$0xff]
      %v435 = vld [vmem:[%s243 + $0x118] sm:$0xff]
      %v436 = vld [vmem:[%s243 + $0x120] sm:$0xff]
      %v437 = vld [vmem:[%s243 + $0x128] sm:$0xff]
      %v438 = vld [vmem:[%s243 + $0x130] sm:$0xff]
      %v439 = vld [vmem:[%s243 + $0x138] sm:$0xff]
      %v440 = vld [vmem:[%s243 + $0x140] sm:$0xff]
      %v441 = vld [vmem:[%s243 + $0x148] sm:$0xff]
      %v442 = vld [vmem:[%s243 + $0x150] sm:$0xff]
      %v443 = vld [vmem:[%s243 + $0x158] sm:$0xff]
      %v444 = vld [vmem:[%s243 + $0x160] sm:$0xff]
      %v445 = vld [vmem:[%s243 + $0x168] sm:$0xff]
      %v446 = vld [vmem:[%s243 + $0x170] sm:$0xff]
      %v447 = vld [vmem:[%s243 + $0x178] sm:$0xff]
      %v448 = vld [vmem:[%s243 + $0x180] sm:$0xff]
      %v449 = vld [vmem:[%s243 + $0x188] sm:$0xff]
      %v450 = vld [vmem:[%s243 + $0x190] sm:$0xff]
      %v451 = vld [vmem:[%s243 + $0x198] sm:$0xff]
      %v452 = vld [vmem:[%s243 + $0x1a0] sm:$0xff]
      %v453 = vld [vmem:[%s243 + $0x1a8] sm:$0xff]
      %v454 = vld [vmem:[%s243 + $0x1b0] sm:$0xff]
      %v455 = vld [vmem:[%s243 + $0x1b8] sm:$0xff]
      %v456 = vld [vmem:[%s243 + $0x1c0] sm:$0xff]
      %v457 = vld [vmem:[%s243 + $0x1c8] sm:$0xff]
      %v458 = vld [vmem:[%s243 + $0x1d0] sm:$0xff]
      %v459 = vld [vmem:[%s243 + $0x1d8] sm:$0xff]
      %v460 = vld [vmem:[%s243 + $0x1e0] sm:$0xff]
      %v461 = vld [vmem:[%s243 + $0x1e8] sm:$0xff]
      %v462 = vld [vmem:[%s243 + $0x1f0] sm:$0xff]
      %v463 = vld [vmem:[%s243 + $0x1f8] sm:$0xff]
      %v464 = vld [vmem:[%s253] sm:$0xf]
      %v465 = vld [vmem:[%s253 + $0x4] sm:$0xf]
      %v466 = vld [vmem:[%s253 + $0x8] sm:$0xf]
      %v467 = vld [vmem:[%s253 + $0xc] sm:$0xf]
      %v468 = vld [vmem:[%s253 + $0x10] sm:$0xf]
      %v469 = vld [vmem:[%s253 + $0x14] sm:$0xf]
      %v470 = vld [vmem:[%s253 + $0x18] sm:$0xf]
      %v471 = vld [vmem:[%s253 + $0x1c] sm:$0xf]
      %v472 = vld [vmem:[%s253 + $0x20] sm:$0xf]
      %v473 = vld [vmem:[%s253 + $0x24] sm:$0xf]
      %v474 = vld [vmem:[%s253 + $0x28] sm:$0xf]
      %v475 = vld [vmem:[%s253 + $0x2c] sm:$0xf]
      %v476 = vld [vmem:[%s253 + $0x30] sm:$0xf]
      %v477 = vld [vmem:[%s253 + $0x34] sm:$0xf]
      %v478 = vld [vmem:[%s253 + $0x38] sm:$0xf]
      %v479 = vld [vmem:[%s253 + $0x3c] sm:$0xf]
      %v480 = vld [vmem:[%s253 + $0x40] sm:$0xf]
      %v481 = vld [vmem:[%s253 + $0x44] sm:$0xf]
      %v482 = vld [vmem:[%s253 + $0x48] sm:$0xf]
      %v483 = vld [vmem:[%s253 + $0x4c] sm:$0xf]
      %v484 = vld [vmem:[%s253 + $0x50] sm:$0xf]
      %v485 = vld [vmem:[%s253 + $0x54] sm:$0xf]
      %v486 = vld [vmem:[%s253 + $0x58] sm:$0xf]
      %v487 = vld [vmem:[%s253 + $0x5c] sm:$0xf]
      %v488 = vld [vmem:[%s253 + $0x60] sm:$0xf]
      %v489 = vld [vmem:[%s253 + $0x64] sm:$0xf]
      %v490 = vld [vmem:[%s253 + $0x68] sm:$0xf]
      %v491 = vld [vmem:[%s253 + $0x6c] sm:$0xf]
      %v492 = vld [vmem:[%s253 + $0x70] sm:$0xf]
      %v493 = vld [vmem:[%s253 + $0x74] sm:$0xf]
      %v494 = vld [vmem:[%s253 + $0x78] sm:$0xf]
      %v495 = vld [vmem:[%s253 + $0x7c] sm:$0xf]
      %v560 = vunpack.c.l.b16 %v400
      %v561 = vunpack.c.h.b16 %v400
      %v562 = vunpack.c.l.b16 %v401
      %v563 = vunpack.c.h.b16 %v401
      %v564 = vunpack.c.l.b16 %v402
      %v565 = vunpack.c.h.b16 %v402
      %v566 = vunpack.c.l.b16 %v403
      %v567 = vunpack.c.h.b16 %v403
      %v568 = vunpack.c.l.b16 %v404
      %v569 = vunpack.c.h.b16 %v404
      %v570 = vunpack.c.l.b16 %v405
      %v571 = vunpack.c.h.b16 %v405
      %v572 = vunpack.c.l.b16 %v406
      %v573 = vunpack.c.h.b16 %v406
      %v574 = vunpack.c.l.b16 %v407
      %v575 = vunpack.c.h.b16 %v407
      %v576 = vunpack.c.l.b16 %v408
      %v577 = vunpack.c.h.b16 %v408
      %v578 = vunpack.c.l.b16 %v409
      %v579 = vunpack.c.h.b16 %v409
      %v580 = vunpack.c.l.b16 %v410
      %v581 = vunpack.c.h.b16 %v410
      %v582 = vunpack.c.l.b16 %v411
      %v583 = vunpack.c.h.b16 %v411
      %v584 = vunpack.c.l.b16 %v412
      %v585 = vunpack.c.h.b16 %v412
      %v586 = vunpack.c.l.b16 %v413
      %v587 = vunpack.c.h.b16 %v413
      %v588 = vunpack.c.l.b16 %v414
      %v589 = vunpack.c.h.b16 %v414
      %v590 = vunpack.c.l.b16 %v415
      %v591 = vunpack.c.h.b16 %v415
      %v592 = vunpack.c.l.b16 %v416
      %v593 = vunpack.c.h.b16 %v416
      %v594 = vunpack.c.l.b16 %v417
      %v595 = vunpack.c.h.b16 %v417
      %v596 = vunpack.c.l.b16 %v418
      %v597 = vunpack.c.h.b16 %v418
      %v598 = vunpack.c.l.b16 %v419
      %v599 = vunpack.c.h.b16 %v419
      %v600 = vunpack.c.l.b16 %v420
      %v601 = vunpack.c.h.b16 %v420
      %v602 = vunpack.c.l.b16 %v421
      %v603 = vunpack.c.h.b16 %v421
      %v604 = vunpack.c.l.b16 %v422
      %v605 = vunpack.c.h.b16 %v422
      %v606 = vunpack.c.l.b16 %v423
      %v607 = vunpack.c.h.b16 %v423
      %v608 = vunpack.c.l.b16 %v424
      %v609 = vunpack.c.h.b16 %v424
      %v610 = vunpack.c.l.b16 %v425
      %v611 = vunpack.c.h.b16 %v425
      %v612 = vunpack.c.l.b16 %v426
      %v613 = vunpack.c.h.b16 %v426
      %v614 = vunpack.c.l.b16 %v427
      %v615 = vunpack.c.h.b16 %v427
      %v616 = vunpack.c.l.b16 %v428
      %v617 = vunpack.c.h.b16 %v428
      %v618 = vunpack.c.l.b16 %v429
      %v619 = vunpack.c.h.b16 %v429
      %v620 = vunpack.c.l.b16 %v430
      %v621 = vunpack.c.h.b16 %v430
      %v622 = vunpack.c.l.b16 %v431
      %v623 = vunpack.c.h.b16 %v431
      %v624 = vunpack.c.l.b16 %v432
      %v625 = vunpack.c.h.b16 %v432
      %v626 = vunpack.c.l.b16 %v433
      %v627 = vunpack.c.h.b16 %v433
      %v628 = vunpack.c.l.b16 %v434
      %v629 = vunpack.c.h.b16 %v434
      %v630 = vunpack.c.l.b16 %v435
      %v631 = vunpack.c.h.b16 %v435
      %v632 = vunpack.c.l.b16 %v436
      %v633 = vunpack.c.h.b16 %v436
      %v634 = vunpack.c.l.b16 %v437
      %v635 = vunpack.c.h.b16 %v437
      %v636 = vunpack.c.l.b16 %v438
      %v637 = vunpack.c.h.b16 %v438
      %v638 = vunpack.c.l.b16 %v439
      %v639 = vunpack.c.h.b16 %v439
      %v640 = vunpack.c.l.b16 %v440
      %v641 = vunpack.c.h.b16 %v440
      %v642 = vunpack.c.l.b16 %v441
      %v643 = vunpack.c.h.b16 %v441
      %v644 = vunpack.c.l.b16 %v442
      %v645 = vunpack.c.h.b16 %v442
      %v646 = vunpack.c.l.b16 %v443
      %v647 = vunpack.c.h.b16 %v443
      %v648 = vunpack.c.l.b16 %v444
      %v649 = vunpack.c.h.b16 %v444
      %v650 = vunpack.c.l.b16 %v445
      %v651 = vunpack.c.h.b16 %v445
      %v652 = vunpack.c.l.b16 %v446
      %v653 = vunpack.c.h.b16 %v446
      %v654 = vunpack.c.l.b16 %v447
      %v655 = vunpack.c.h.b16 %v447
      %v656 = vunpack.c.l.b16 %v448
      %v657 = vunpack.c.h.b16 %v448
      %v658 = vunpack.c.l.b16 %v449
      %v659 = vunpack.c.h.b16 %v449
      %v660 = vunpack.c.l.b16 %v450
      %v661 = vunpack.c.h.b16 %v450
      %v662 = vunpack.c.l.b16 %v451
      %v663 = vunpack.c.h.b16 %v451
      %v664 = vunpack.c.l.b16 %v452
      %v665 = vunpack.c.h.b16 %v452
      %v666 = vunpack.c.l.b16 %v453
      %v667 = vunpack.c.h.b16 %v453
      %v668 = vunpack.c.l.b16 %v454
      %v669 = vunpack.c.h.b16 %v454
      %v670 = vunpack.c.l.b16 %v455
      %v671 = vunpack.c.h.b16 %v455
      %v672 = vunpack.c.l.b16 %v456
      %v673 = vunpack.c.h.b16 %v456
      %v674 = vunpack.c.l.b16 %v457
      %v675 = vunpack.c.h.b16 %v457
      %v676 = vunpack.c.l.b16 %v458
      %v677 = vunpack.c.h.b16 %v458
      %v678 = vunpack.c.l.b16 %v459
      %v679 = vunpack.c.h.b16 %v459
      %v680 = vunpack.c.l.b16 %v460
      %v681 = vunpack.c.h.b16 %v460
      %v682 = vunpack.c.l.b16 %v461
      %v683 = vunpack.c.h.b16 %v461
      %v684 = vunpack.c.l.b16 %v462
      %v685 = vunpack.c.h.b16 %v462
      %v686 = vunpack.c.l.b16 %v463
      %v687 = vunpack.c.h.b16 %v463
      %v688 = vpack.c.b16 %v562, %v560
      %v689 = vpack.c.b16 %v563, %v561
      %v690 = vpack.c.b16 %v566, %v564
      %v691 = vpack.c.b16 %v567, %v565
      %v692 = vpack.c.b16 %v570, %v568
      %v693 = vpack.c.b16 %v571, %v569
      %v694 = vpack.c.b16 %v574, %v572
      %v695 = vpack.c.b16 %v575, %v573
      %v696 = vpack.c.b16 %v578, %v576
      %v697 = vpack.c.b16 %v579, %v577
      %v698 = vpack.c.b16 %v582, %v580
      %v699 = vpack.c.b16 %v583, %v581
      %v700 = vpack.c.b16 %v586, %v584
      %v701 = vpack.c.b16 %v587, %v585
      %v702 = vpack.c.b16 %v590, %v588
      %v703 = vpack.c.b16 %v591, %v589
      %v704 = vpack.c.b16 %v594, %v592
      %v705 = vpack.c.b16 %v595, %v593
      %v706 = vpack.c.b16 %v598, %v596
      %v707 = vpack.c.b16 %v599, %v597
      %v708 = vpack.c.b16 %v602, %v600
      %v709 = vpack.c.b16 %v603, %v601
      %v710 = vpack.c.b16 %v606, %v604
      %v711 = vpack.c.b16 %v607, %v605
      %v712 = vpack.c.b16 %v610, %v608
      %v713 = vpack.c.b16 %v611, %v609
      %v714 = vpack.c.b16 %v614, %v612
      %v715 = vpack.c.b16 %v615, %v613
      %v716 = vpack.c.b16 %v618, %v616
      %v717 = vpack.c.b16 %v619, %v617
      %v718 = vpack.c.b16 %v622, %v620
      %v719 = vpack.c.b16 %v623, %v621
      %v720 = vpack.c.b16 %v626, %v624
      %v721 = vpack.c.b16 %v627, %v625
      %v722 = vpack.c.b16 %v630, %v628
      %v723 = vpack.c.b16 %v631, %v629
      %v724 = vpack.c.b16 %v634, %v632
      %v725 = vpack.c.b16 %v635, %v633
      %v726 = vpack.c.b16 %v638, %v636
      %v727 = vpack.c.b16 %v639, %v637
      %v728 = vpack.c.b16 %v642, %v640
      %v729 = vpack.c.b16 %v643, %v641
      %v730 = vpack.c.b16 %v646, %v644
      %v731 = vpack.c.b16 %v647, %v645
      %v732 = vpack.c.b16 %v650, %v648
      %v733 = vpack.c.b16 %v651, %v649
      %v734 = vpack.c.b16 %v654, %v652
      %v735 = vpack.c.b16 %v655, %v653
      %v736 = vpack.c.b16 %v658, %v656
      %v737 = vpack.c.b16 %v659, %v657
      %v738 = vpack.c.b16 %v662, %v660
      %v739 = vpack.c.b16 %v663, %v661
      %v740 = vpack.c.b16 %v666, %v664
      %v741 = vpack.c.b16 %v667, %v665
      %v742 = vpack.c.b16 %v670, %v668
      %v743 = vpack.c.b16 %v671, %v669
      %v744 = vpack.c.b16 %v674, %v672
      %v745 = vpack.c.b16 %v675, %v673
      %v746 = vpack.c.b16 %v678, %v676
      %v747 = vpack.c.b16 %v679, %v677
      %v748 = vpack.c.b16 %v682, %v680
      %v749 = vpack.c.b16 %v683, %v681
      %v750 = vpack.c.b16 %v686, %v684
      %v751 = vpack.c.b16 %v687, %v685
      %v848 = vunpack.c.l.b16 %v464
      %v849 = vunpack.c.l.b16 %v465
      %v850 = vunpack.c.l.b16 %v466
      %v851 = vunpack.c.l.b16 %v467
      %v852 = vunpack.c.l.b16 %v468
      %v853 = vunpack.c.l.b16 %v469
      %v854 = vunpack.c.l.b16 %v470
      %v855 = vunpack.c.l.b16 %v471
      %v856 = vunpack.c.l.b16 %v472
      %v857 = vunpack.c.l.b16 %v473
      %v858 = vunpack.c.l.b16 %v474
      %v859 = vunpack.c.l.b16 %v475
      %v860 = vunpack.c.l.b16 %v476
      %v861 = vunpack.c.l.b16 %v477
      %v862 = vunpack.c.l.b16 %v478
      %v863 = vunpack.c.l.b16 %v479
      %v864 = vunpack.c.l.b16 %v480
      %v865 = vunpack.c.l.b16 %v481
      %v866 = vunpack.c.l.b16 %v482
      %v867 = vunpack.c.l.b16 %v483
      %v868 = vunpack.c.l.b16 %v484
      %v869 = vunpack.c.l.b16 %v485
      %v870 = vunpack.c.l.b16 %v486
      %v871 = vunpack.c.l.b16 %v487
      %v872 = vunpack.c.l.b16 %v488
      %v873 = vunpack.c.l.b16 %v489
      %v874 = vunpack.c.l.b16 %v490
      %v875 = vunpack.c.l.b16 %v491
      %v876 = vunpack.c.l.b16 %v492
      %v877 = vunpack.c.l.b16 %v493
      %v878 = vunpack.c.l.b16 %v494
      %v879 = vunpack.c.l.b16 %v495
      %v880 = vpack.c.b16 %v849, %v848
      %v881 = vpack.c.b16 %v851, %v850
      %v882 = vpack.c.b16 %v853, %v852
      %v883 = vpack.c.b16 %v855, %v854
      %v884 = vpack.c.b16 %v857, %v856
      %v885 = vpack.c.b16 %v859, %v858
      %v886 = vpack.c.b16 %v861, %v860
      %v887 = vpack.c.b16 %v863, %v862
      %v888 = vpack.c.b16 %v865, %v864
      %v889 = vpack.c.b16 %v867, %v866
      %v890 = vpack.c.b16 %v869, %v868
      %v891 = vpack.c.b16 %v871, %v870
      %v892 = vpack.c.b16 %v873, %v872
      %v893 = vpack.c.b16 %v875, %v874
      %v894 = vpack.c.b16 %v877, %v876
      %v895 = vpack.c.b16 %v879, %v878
      %912 = vmatprep.subr.bf16.mxu0 0
      %913 = vmatpush1.bf16.msra.mxu0 %v887
      %914 = vmatprep.subr.bf16.mxu0 0
      %915 = vmatpush1.bf16.msra.mxu0 %v886
      %916 = vmatprep.subr.bf16.mxu0 0
      %917 = vmatpush1.bf16.msra.mxu0 %v885
      %918 = vmatprep.subr.bf16.mxu0 0
      %919 = vmatpush1.bf16.msra.mxu0 %v884
      %920 = vmatprep.subr.bf16.mxu0 0
      %921 = vmatpush1.bf16.msra.mxu0 %v883
      %922 = vmatprep.subr.bf16.mxu0 0
      %923 = vmatpush1.bf16.msra.mxu0 %v882
      %924 = vmatprep.subr.bf16.mxu0 0
      %925 = vmatpush1.bf16.msra.mxu0 %v881
      %926 = vmatprep.subr.bf16.mxu0 0
      %927 = vmatpush1.bf16.msra.mxu0 %v880
      %928 = vmatprep.subr.bf16.mxu0 0
      %929 = vmatpush2.bf16.msra.mxu0 %v895
      %930 = vmatprep.subr.bf16.mxu0 0
      %931 = vmatpush2.bf16.msra.mxu0 %v894
      %932 = vmatprep.subr.bf16.mxu0 0
      %933 = vmatpush2.bf16.msra.mxu0 %v893
      %934 = vmatprep.subr.bf16.mxu0 0
      %935 = vmatpush2.bf16.msra.mxu0 %v892
      %936 = vmatprep.subr.bf16.mxu0 0
      %937 = vmatpush2.bf16.msra.mxu0 %v891
      %938 = vmatprep.subr.bf16.mxu0 0
      %939 = vmatpush2.bf16.msra.mxu0 %v890
      %940 = vmatprep.subr.bf16.mxu0 0
      %941 = vmatpush2.bf16.msra.mxu0 %v889
      %942 = vmatprep.subr.bf16.mxu0 0
      %943 = vmatpush2.bf16.msra.mxu0 %v888
      %944 = vmatprep.mubr.bf16.mxu0 %v689
      %945 = vmatmul.mubr.bf16.gmra.mxu0 %v688
      %v946 = vpop.f32.mrf.mxu0
      %v947 = vadd.f32 0.0, %v946
      %v948 = vpop.f32.mrf.mxu0
      %v949 = vpop.f32.mrf.mxu0
      %v950 = vadd.f32 0.0, %v949
      %v951 = vpop.f32.mrf.mxu0
      %952 = vmatprep.mubr.bf16.mxu0 %v691
      %953 = vmatmul.mubr.bf16.gmra.mxu0 %v690
      %v954 = vpop.f32.mrf.mxu0
      %v955 = vadd.f32 0.0, %v954
      %v956 = vpop.f32.mrf.mxu0
      %v957 = vpop.f32.mrf.mxu0
      %v958 = vadd.f32 0.0, %v957
      %v959 = vpop.f32.mrf.mxu0
      %960 = vmatprep.mubr.bf16.mxu0 %v693
      %961 = vmatmul.mubr.bf16.gmra.mxu0 %v692
      %v962 = vpop.f32.mrf.mxu0
      %v963 = vadd.f32 0.0, %v962
      %v964 = vpop.f32.mrf.mxu0
      %v965 = vpop.f32.mrf.mxu0
      %v966 = vadd.f32 0.0, %v965
      %v967 = vpop.f32.mrf.mxu0
      %968 = vmatprep.mubr.bf16.mxu0 %v695
      %969 = vmatmul.mubr.bf16.gmra.mxu0 %v694
      %v970 = vpop.f32.mrf.mxu0
      %v971 = vadd.f32 0.0, %v970
      %v972 = vpop.f32.mrf.mxu0
      %v973 = vpop.f32.mrf.mxu0
      %v974 = vadd.f32 0.0, %v973
      %v975 = vpop.f32.mrf.mxu0
      %976 = vmatprep.mubr.bf16.mxu0 %v697
      %977 = vmatmul.mubr.bf16.gmra.mxu0 %v696
      %v978 = vpop.f32.mrf.mxu0
      %v979 = vadd.f32 0.0, %v978
      %v980 = vpop.f32.mrf.mxu0
      %v981 = vpop.f32.mrf.mxu0
      %v982 = vadd.f32 0.0, %v981
      %v983 = vpop.f32.mrf.mxu0
      %984 = vmatprep.mubr.bf16.mxu0 %v699
      %985 = vmatmul.mubr.bf16.gmra.mxu0 %v698
      %v986 = vpop.f32.mrf.mxu0
      %v987 = vadd.f32 0.0, %v986
      %v988 = vpop.f32.mrf.mxu0
      %v989 = vpop.f32.mrf.mxu0
      %v990 = vadd.f32 0.0, %v989
      %v991 = vpop.f32.mrf.mxu0
      %992 = vmatprep.mubr.bf16.mxu0 %v701
      %993 = vmatmul.mubr.bf16.gmra.mxu0 %v700
      %v994 = vpop.f32.mrf.mxu0
      %v995 = vadd.f32 0.0, %v994
      %v996 = vpop.f32.mrf.mxu0
      %v997 = vpop.f32.mrf.mxu0
      %v998 = vadd.f32 0.0, %v997
      %v999 = vpop.f32.mrf.mxu0
      %1000 = vmatprep.mubr.bf16.mxu0 %v703
      %1001 = vmatmul.mubr.bf16.gmra.mxu0 %v702
      %v1002 = vpop.f32.mrf.mxu0
      %v1003 = vadd.f32 0.0, %v1002
      %v1004 = vpop.f32.mrf.mxu0
      %v1005 = vpop.f32.mrf.mxu0
      %v1006 = vadd.f32 0.0, %v1005
      %v1007 = vpop.f32.mrf.mxu0
      %1008 = vmatprep.mubr.bf16.mxu0 %v705
      %1009 = vmatmul.mubr.bf16.gmra.mxu0 %v704
      %v1010 = vpop.f32.mrf.mxu0
      %v1011 = vadd.f32 0.0, %v1010
      %v1012 = vpop.f32.mrf.mxu0
      %v1013 = vpop.f32.mrf.mxu0
      %v1014 = vadd.f32 0.0, %v1013
      %v1015 = vpop.f32.mrf.mxu0
      %1016 = vmatprep.mubr.bf16.mxu0 %v707
      %1017 = vmatmul.mubr.bf16.gmra.mxu0 %v706
      %v1018 = vpop.f32.mrf.mxu0
      %v1019 = vadd.f32 0.0, %v1018
      %v1020 = vpop.f32.mrf.mxu0
      %v1021 = vpop.f32.mrf.mxu0
      %v1022 = vadd.f32 0.0, %v1021
      %v1023 = vpop.f32.mrf.mxu0
      %1024 = vmatprep.mubr.bf16.mxu0 %v709
      %1025 = vmatmul.mubr.bf16.gmra.mxu0 %v708
      %v1026 = vpop.f32.mrf.mxu0
      %v1027 = vadd.f32 0.0, %v1026
      %v1028 = vpop.f32.mrf.mxu0
      %v1029 = vpop.f32.mrf.mxu0
      %v1030 = vadd.f32 0.0, %v1029
      %v1031 = vpop.f32.mrf.mxu0
      %1032 = vmatprep.mubr.bf16.mxu0 %v711
      %1033 = vmatmul.mubr.bf16.gmra.mxu0 %v710
      %v1034 = vpop.f32.mrf.mxu0
      %v1035 = vadd.f32 0.0, %v1034
      %v1036 = vpop.f32.mrf.mxu0
      %v1037 = vpop.f32.mrf.mxu0
      %v1038 = vadd.f32 0.0, %v1037
      %v1039 = vpop.f32.mrf.mxu0
      %1040 = vmatprep.mubr.bf16.mxu0 %v713
      %1041 = vmatmul.mubr.bf16.gmra.mxu0 %v712
      %v1042 = vpop.f32.mrf.mxu0
      %v1043 = vadd.f32 0.0, %v1042
      %v1044 = vpop.f32.mrf.mxu0
      %v1045 = vpop.f32.mrf.mxu0
      %v1046 = vadd.f32 0.0, %v1045
      %v1047 = vpop.f32.mrf.mxu0
      %1048 = vmatprep.mubr.bf16.mxu0 %v715
      %1049 = vmatmul.mubr.bf16.gmra.mxu0 %v714
      %v1050 = vpop.f32.mrf.mxu0
      %v1051 = vadd.f32 0.0, %v1050
      %v1052 = vpop.f32.mrf.mxu0
      %v1053 = vpop.f32.mrf.mxu0
      %v1054 = vadd.f32 0.0, %v1053
      %v1055 = vpop.f32.mrf.mxu0
      %1056 = vmatprep.mubr.bf16.mxu0 %v717
      %1057 = vmatmul.mubr.bf16.gmra.mxu0 %v716
      %v1058 = vpop.f32.mrf.mxu0
      %v1059 = vadd.f32 0.0, %v1058
      %v1060 = vpop.f32.mrf.mxu0
      %v1061 = vpop.f32.mrf.mxu0
      %v1062 = vadd.f32 0.0, %v1061
      %v1063 = vpop.f32.mrf.mxu0
      %1064 = vmatprep.mubr.bf16.mxu0 %v719
      %1065 = vmatmul.mubr.bf16.gmra.mxu0 %v718
      %v1066 = vpop.f32.mrf.mxu0
      %v1067 = vadd.f32 0.0, %v1066
      %v1068 = vpop.f32.mrf.mxu0
      %v1069 = vpop.f32.mrf.mxu0
      %v1070 = vadd.f32 0.0, %v1069
      %v1071 = vpop.f32.mrf.mxu0
      %1072 = vmatprep.mubr.bf16.mxu0 %v721
      %1073 = vmatmul.mubr.bf16.gmra.mxu0 %v720
      %v1074 = vpop.f32.mrf.mxu0
      %v1075 = vadd.f32 0.0, %v1074
      %v1076 = vpop.f32.mrf.mxu0
      %v1077 = vpop.f32.mrf.mxu0
      %v1078 = vadd.f32 0.0, %v1077
      %v1079 = vpop.f32.mrf.mxu0
      %1080 = vmatprep.mubr.bf16.mxu0 %v723
      %1081 = vmatmul.mubr.bf16.gmra.mxu0 %v722
      %v1082 = vpop.f32.mrf.mxu0
      %v1083 = vadd.f32 0.0, %v1082
      %v1084 = vpop.f32.mrf.mxu0
      %v1085 = vpop.f32.mrf.mxu0
      %v1086 = vadd.f32 0.0, %v1085
      %v1087 = vpop.f32.mrf.mxu0
      %1088 = vmatprep.mubr.bf16.mxu0 %v725
      %1089 = vmatmul.mubr.bf16.gmra.mxu0 %v724
      %v1090 = vpop.f32.mrf.mxu0
      %v1091 = vadd.f32 0.0, %v1090
      %v1092 = vpop.f32.mrf.mxu0
      %v1093 = vpop.f32.mrf.mxu0
      %v1094 = vadd.f32 0.0, %v1093
      %v1095 = vpop.f32.mrf.mxu0
      %1096 = vmatprep.mubr.bf16.mxu0 %v727
      %1097 = vmatmul.mubr.bf16.gmra.mxu0 %v726
      %v1098 = vpop.f32.mrf.mxu0
      %v1099 = vadd.f32 0.0, %v1098
      %v1100 = vpop.f32.mrf.mxu0
      %v1101 = vpop.f32.mrf.mxu0
      %v1102 = vadd.f32 0.0, %v1101
      %v1103 = vpop.f32.mrf.mxu0
      %1104 = vmatprep.mubr.bf16.mxu0 %v729
      %1105 = vmatmul.mubr.bf16.gmra.mxu0 %v728
      %v1106 = vpop.f32.mrf.mxu0
      %v1107 = vadd.f32 0.0, %v1106
      %v1108 = vpop.f32.mrf.mxu0
      %v1109 = vpop.f32.mrf.mxu0
      %v1110 = vadd.f32 0.0, %v1109
      %v1111 = vpop.f32.mrf.mxu0
      %1112 = vmatprep.mubr.bf16.mxu0 %v731
      %1113 = vmatmul.mubr.bf16.gmra.mxu0 %v730
      %v1114 = vpop.f32.mrf.mxu0
      %v1115 = vadd.f32 0.0, %v1114
      %v1116 = vpop.f32.mrf.mxu0
      %v1117 = vpop.f32.mrf.mxu0
      %v1118 = vadd.f32 0.0, %v1117
      %v1119 = vpop.f32.mrf.mxu0
      %1120 = vmatprep.mubr.bf16.mxu0 %v733
      %1121 = vmatmul.mubr.bf16.gmra.mxu0 %v732
      %v1122 = vpop.f32.mrf.mxu0
      %v1123 = vadd.f32 0.0, %v1122
      %v1124 = vpop.f32.mrf.mxu0
      %v1125 = vpop.f32.mrf.mxu0
      %v1126 = vadd.f32 0.0, %v1125
      %v1127 = vpop.f32.mrf.mxu0
      %1128 = vmatprep.mubr.bf16.mxu0 %v735
      %1129 = vmatmul.mubr.bf16.gmra.mxu0 %v734
      %v1130 = vpop.f32.mrf.mxu0
      %v1131 = vadd.f32 0.0, %v1130
      %v1132 = vpop.f32.mrf.mxu0
      %v1133 = vpop.f32.mrf.mxu0
      %v1134 = vadd.f32 0.0, %v1133
      %v1135 = vpop.f32.mrf.mxu0
      %1136 = vmatprep.mubr.bf16.mxu0 %v737
      %1137 = vmatmul.mubr.bf16.gmra.mxu0 %v736
      %v1138 = vpop.f32.mrf.mxu0
      %v1139 = vadd.f32 0.0, %v1138
      %v1140 = vpop.f32.mrf.mxu0
      %v1141 = vpop.f32.mrf.mxu0
      %v1142 = vadd.f32 0.0, %v1141
      %v1143 = vpop.f32.mrf.mxu0
      %1144 = vmatprep.mubr.bf16.mxu0 %v739
      %1145 = vmatmul.mubr.bf16.gmra.mxu0 %v738
      %v1146 = vpop.f32.mrf.mxu0
      %v1147 = vadd.f32 0.0, %v1146
      %v1148 = vpop.f32.mrf.mxu0
      %v1149 = vpop.f32.mrf.mxu0
      %v1150 = vadd.f32 0.0, %v1149
      %v1151 = vpop.f32.mrf.mxu0
      %1152 = vmatprep.mubr.bf16.mxu0 %v741
      %1153 = vmatmul.mubr.bf16.gmra.mxu0 %v740
      %v1154 = vpop.f32.mrf.mxu0
      %v1155 = vadd.f32 0.0, %v1154
      %v1156 = vpop.f32.mrf.mxu0
      %v1157 = vpop.f32.mrf.mxu0
      %v1158 = vadd.f32 0.0, %v1157
      %v1159 = vpop.f32.mrf.mxu0
      %1160 = vmatprep.mubr.bf16.mxu0 %v743
      %1161 = vmatmul.mubr.bf16.gmra.mxu0 %v742
      %v1162 = vpop.f32.mrf.mxu0
      %v1163 = vadd.f32 0.0, %v1162
      %v1164 = vpop.f32.mrf.mxu0
      %v1165 = vpop.f32.mrf.mxu0
      %v1166 = vadd.f32 0.0, %v1165
      %v1167 = vpop.f32.mrf.mxu0
      %1168 = vmatprep.mubr.bf16.mxu0 %v745
      %1169 = vmatmul.mubr.bf16.gmra.mxu0 %v744
      %v1170 = vpop.f32.mrf.mxu0
      %v1171 = vadd.f32 0.0, %v1170
      %v1172 = vpop.f32.mrf.mxu0
      %v1173 = vpop.f32.mrf.mxu0
      %v1174 = vadd.f32 0.0, %v1173
      %v1175 = vpop.f32.mrf.mxu0
      %1176 = vmatprep.mubr.bf16.mxu0 %v747
      %1177 = vmatmul.mubr.bf16.gmra.mxu0 %v746
      %v1178 = vpop.f32.mrf.mxu0
      %v1179 = vadd.f32 0.0, %v1178
      %v1180 = vpop.f32.mrf.mxu0
      %v1181 = vpop.f32.mrf.mxu0
      %v1182 = vadd.f32 0.0, %v1181
      %v1183 = vpop.f32.mrf.mxu0
      %1184 = vmatprep.mubr.bf16.mxu0 %v749
      %1185 = vmatmul.mubr.bf16.gmra.mxu0 %v748
      %v1186 = vpop.f32.mrf.mxu0
      %v1187 = vadd.f32 0.0, %v1186
      %v1188 = vpop.f32.mrf.mxu0
      %v1189 = vpop.f32.mrf.mxu0
      %v1190 = vadd.f32 0.0, %v1189
      %v1191 = vpop.f32.mrf.mxu0
      %1192 = vmatprep.mubr.bf16.mxu0 %v751
      %1193 = vmatmul.mubr.bf16.gmra.mxu0 %v750
      %v1194 = vpop.f32.mrf.mxu0
      %v1195 = vadd.f32 0.0, %v1194
      %v1196 = vpop.f32.mrf.mxu0
      %v1197 = vpop.f32.mrf.mxu0
      %v1198 = vadd.f32 0.0, %v1197
      %v1199 = vpop.f32.mrf.mxu0
      %1200 = vdwg.mxu0
      %v1201 = vadd.f32 %v336, %v947
      %v1202 = vadd.f32 %v337, %v950
      %v1203 = vadd.f32 %v338, %v955
      %v1204 = vadd.f32 %v339, %v958
      %v1205 = vadd.f32 %v340, %v963
      %v1206 = vadd.f32 %v341, %v966
      %v1207 = vadd.f32 %v342, %v971
      %v1208 = vadd.f32 %v343, %v974
      %v1209 = vadd.f32 %v344, %v979
      %v1210 = vadd.f32 %v345, %v982
      %v1211 = vadd.f32 %v346, %v987
      %v1212 = vadd.f32 %v347, %v990
      %v1213 = vadd.f32 %v348, %v995
      %v1214 = vadd.f32 %v349, %v998
      %v1215 = vadd.f32 %v350, %v1003
      %v1216 = vadd.f32 %v351, %v1006
      %v1217 = vadd.f32 %v352, %v1011
      %v1218 = vadd.f32 %v353, %v1014
      %v1219 = vadd.f32 %v354, %v1019
      %v1220 = vadd.f32 %v355, %v1022
      %v1221 = vadd.f32 %v356, %v1027
      %v1222 = vadd.f32 %v357, %v1030
      %v1223 = vadd.f32 %v358, %v1035
      %v1224 = vadd.f32 %v359, %v1038
      %v1225 = vadd.f32 %v360, %v1043
      %v1226 = vadd.f32 %v361, %v1046
      %v1227 = vadd.f32 %v362, %v1051
      %v1228 = vadd.f32 %v363, %v1054
      %v1229 = vadd.f32 %v364, %v1059
      %v1230 = vadd.f32 %v365, %v1062
      %v1231 = vadd.f32 %v366, %v1067
      %v1232 = vadd.f32 %v367, %v1070
      %v1233 = vadd.f32 %v368, %v1075
      %v1234 = vadd.f32 %v369, %v1078
      %v1235 = vadd.f32 %v370, %v1083
      %v1236 = vadd.f32 %v371, %v1086
      %v1237 = vadd.f32 %v372, %v1091
      %v1238 = vadd.f32 %v373, %v1094
      %v1239 = vadd.f32 %v374, %v1099
      %v1240 = vadd.f32 %v375, %v1102
      %v1241 = vadd.f32 %v376, %v1107
      %v1242 = vadd.f32 %v377, %v1110
      %v1243 = vadd.f32 %v378, %v1115
      %v1244 = vadd.f32 %v379, %v1118
      %v1245 = vadd.f32 %v380, %v1123
      %v1246 = vadd.f32 %v381, %v1126
      %v1247 = vadd.f32 %v382, %v1131
      %v1248 = vadd.f32 %v383, %v1134
      %v1249 = vadd.f32 %v384, %v1139
      %v1250 = vadd.f32 %v385, %v1142
      %v1251 = vadd.f32 %v386, %v1147
      %v1252 = vadd.f32 %v387, %v1150
      %v1253 = vadd.f32 %v388, %v1155
      %v1254 = vadd.f32 %v389, %v1158
      %v1255 = vadd.f32 %v390, %v1163
      %v1256 = vadd.f32 %v391, %v1166
      %v1257 = vadd.f32 %v392, %v1171
      %v1258 = vadd.f32 %v393, %v1174
      %v1259 = vadd.f32 %v394, %v1179
      %v1260 = vadd.f32 %v395, %v1182
      %v1261 = vadd.f32 %v396, %v1187
      %v1262 = vadd.f32 %v397, %v1190
      %v1263 = vadd.f32 %v398, %v1195
      %v1264 = vadd.f32 %v399, %v1198
      %1265 = vst [vmem:[#allocation2] sm:$0xff] %v1201
      %1266 = vst [vmem:[#allocation2 + $0x8] sm:$0xff] %v1202
      %1267 = vst [vmem:[#allocation2 + $0x10] sm:$0xff] %v1203
      %1268 = vst [vmem:[#allocation2 + $0x18] sm:$0xff] %v1204
      %1269 = vst [vmem:[#allocation2 + $0x20] sm:$0xff] %v1205
      %1270 = vst [vmem:[#allocation2 + $0x28] sm:$0xff] %v1206
      %1271 = vst [vmem:[#allocation2 + $0x30] sm:$0xff] %v1207
      %1272 = vst [vmem:[#allocation2 + $0x38] sm:$0xff] %v1208
      %1273 = vst [vmem:[#allocation2 + $0x40] sm:$0xff] %v1209
      %1274 = vst [vmem:[#allocation2 + $0x48] sm:$0xff] %v1210
      %1275 = vst [vmem:[#allocation2 + $0x50] sm:$0xff] %v1211
      %1276 = vst [vmem:[#allocation2 + $0x58] sm:$0xff] %v1212
      %1277 = vst [vmem:[#allocation2 + $0x60] sm:$0xff] %v1213
      %1278 = vst [vmem:[#allocation2 + $0x68] sm:$0xff] %v1214
      %1279 = vst [vmem:[#allocation2 + $0x70] sm:$0xff] %v1215
      %1280 = vst [vmem:[#allocation2 + $0x78] sm:$0xff] %v1216
      %1281 = vst [vmem:[#allocation2 + $0x80] sm:$0xff] %v1217
      %1282 = vst [vmem:[#allocation2 + $0x88] sm:$0xff] %v1218
      %1283 = vst [vmem:[#allocation2 + $0x90] sm:$0xff] %v1219
      %1284 = vst [vmem:[#allocation2 + $0x98] sm:$0xff] %v1220
      %1285 = vst [vmem:[#allocation2 + $0xa0] sm:$0xff] %v1221
      %1286 = vst [vmem:[#allocation2 + $0xa8] sm:$0xff] %v1222
      %1287 = vst [vmem:[#allocation2 + $0xb0] sm:$0xff] %v1223
      %1288 = vst [vmem:[#allocation2 + $0xb8] sm:$0xff] %v1224
      %1289 = vst [vmem:[#allocation2 + $0xc0] sm:$0xff] %v1225
      %1290 = vst [vmem:[#allocation2 + $0xc8] sm:$0xff] %v1226
      %1291 = vst [vmem:[#allocation2 + $0xd0] sm:$0xff] %v1227
      %1292 = vst [vmem:[#allocation2 + $0xd8] sm:$0xff] %v1228
      %1293 = vst [vmem:[#allocation2 + $0xe0] sm:$0xff] %v1229
      %1294 = vst [vmem:[#allocation2 + $0xe8] sm:$0xff] %v1230
      %1295 = vst [vmem:[#allocation2 + $0xf0] sm:$0xff] %v1231
      %1296 = vst [vmem:[#allocation2 + $0xf8] sm:$0xff] %v1232
      %1297 = vst [vmem:[#allocation2 + $0x100] sm:$0xff] %v1233
      %1298 = vst [vmem:[#allocation2 + $0x108] sm:$0xff] %v1234
      %1299 = vst [vmem:[#allocation2 + $0x110] sm:$0xff] %v1235
      %1300 = vst [vmem:[#allocation2 + $0x118] sm:$0xff] %v1236
      %1301 = vst [vmem:[#allocation2 + $0x120] sm:$0xff] %v1237
      %1302 = vst [vmem:[#allocation2 + $0x128] sm:$0xff] %v1238
      %1303 = vst [vmem:[#allocation2 + $0x130] sm:$0xff] %v1239
      %1304 = vst [vmem:[#allocation2 + $0x138] sm:$0xff] %v1240
      %1305 = vst [vmem:[#allocation2 + $0x140] sm:$0xff] %v1241
      %1306 = vst [vmem:[#allocation2 + $0x148] sm:$0xff] %v1242
      %1307 = vst [vmem:[#allocation2 + $0x150] sm:$0xff] %v1243
      %1308 = vst [vmem:[#allocation2 + $0x158] sm:$0xff] %v1244
      %1309 = vst [vmem:[#allocation2 + $0x160] sm:$0xff] %v1245
      %1310 = vst [vmem:[#allocation2 + $0x168] sm:$0xff] %v1246
      %1311 = vst [vmem:[#allocation2 + $0x170] sm:$0xff] %v1247
      %1312 = vst [vmem:[#allocation2 + $0x178] sm:$0xff] %v1248
      %1313 = vst [vmem:[#allocation2 + $0x180] sm:$0xff] %v1249
      %1314 = vst [vmem:[#allocation2 + $0x188] sm:$0xff] %v1250
      %1315 = vst [vmem:[#allocation2 + $0x190] sm:$0xff] %v1251
      %1316 = vst [vmem:[#allocation2 + $0x198] sm:$0xff] %v1252
      %1317 = vst [vmem:[#allocation2 + $0x1a0] sm:$0xff] %v1253
      %1318 = vst [vmem:[#allocation2 + $0x1a8] sm:$0xff] %v1254
      %1319 = vst [vmem:[#allocation2 + $0x1b0] sm:$0xff] %v1255
      %1320 = vst [vmem:[#allocation2 + $0x1b8] sm:$0xff] %v1256
      %1321 = vst [vmem:[#allocation2 + $0x1c0] sm:$0xff] %v1257
      %1322 = vst [vmem:[#allocation2 + $0x1c8] sm:$0xff] %v1258
      %1323 = vst [vmem:[#allocation2 + $0x1d0] sm:$0xff] %v1259
      %1324 = vst [vmem:[#allocation2 + $0x1d8] sm:$0xff] %v1260
      %1325 = vst [vmem:[#allocation2 + $0x1e0] sm:$0xff] %v1261
      %1326 = vst [vmem:[#allocation2 + $0x1e8] sm:$0xff] %v1262
      %1327 = vst [vmem:[#allocation2 + $0x1f0] sm:$0xff] %v1263
      %1328 = vst [vmem:[#allocation2 + $0x1f8] sm:$0xff] %v1264
      // Predicated region
      $region37: #{fused_matmul.1} parent=31 // pred_check
        %p1329 = pneg %p268
      $region38: #{fused_matmul.1} parent=31 // pred_check_branch
        %1331 = sbr.rel (%p1329) target = $region40
      $region39: #{fused_matmul.1} parent=31 // pred_region
        %v1332 = vld [vmem:[#allocation2] sm:$0xff]
        %v1333 = vld [vmem:[#allocation2 + $0x8] sm:$0xff]
        %v1334 = vld [vmem:[#allocation2 + $0x10] sm:$0xff]
        %v1335 = vld [vmem:[#allocation2 + $0x18] sm:$0xff]
        %v1336 = vld [vmem:[#allocation2 + $0x20] sm:$0xff]
        %v1337 = vld [vmem:[#allocation2 + $0x28] sm:$0xff]
        %v1338 = vld [vmem:[#allocation2 + $0x30] sm:$0xff]
        %v1339 = vld [vmem:[#allocation2 + $0x38] sm:$0xff]
        %v1340 = vld [vmem:[#allocation2 + $0x40] sm:$0xff]
        %v1341 = vld [vmem:[#allocation2 + $0x48] sm:$0xff]
        %v1342 = vld [vmem:[#allocation2 + $0x50] sm:$0xff]
        %v1343 = vld [vmem:[#allocation2 + $0x58] sm:$0xff]
        %v1344 = vld [vmem:[#allocation2 + $0x60] sm:$0xff]
        %v1345 = vld [vmem:[#allocation2 + $0x68] sm:$0xff]
        %v1346 = vld [vmem:[#allocation2 + $0x70] sm:$0xff]
        %v1347 = vld [vmem:[#allocation2 + $0x78] sm:$0xff]
        %v1348 = vld [vmem:[#allocation2 + $0x80] sm:$0xff]
        %v1349 = vld [vmem:[#allocation2 + $0x88] sm:$0xff]
        %v1350 = vld [vmem:[#allocation2 + $0x90] sm:$0xff]
        %v1351 = vld [vmem:[#allocation2 + $0x98] sm:$0xff]
        %v1352 = vld [vmem:[#allocation2 + $0xa0] sm:$0xff]
        %v1353 = vld [vmem:[#allocation2 + $0xa8] sm:$0xff]
        %v1354 = vld [vmem:[#allocation2 + $0xb0] sm:$0xff]
        %v1355 = vld [vmem:[#allocation2 + $0xb8] sm:$0xff]
        %v1356 = vld [vmem:[#allocation2 + $0xc0] sm:$0xff]
        %v1357 = vld [vmem:[#allocation2 + $0xc8] sm:$0xff]
        %v1358 = vld [vmem:[#allocation2 + $0xd0] sm:$0xff]
        %v1359 = vld [vmem:[#allocation2 + $0xd8] sm:$0xff]
        %v1360 = vld [vmem:[#allocation2 + $0xe0] sm:$0xff]
        %v1361 = vld [vmem:[#allocation2 + $0xe8] sm:$0xff]
        %v1362 = vld [vmem:[#allocation2 + $0xf0] sm:$0xff]
        %v1363 = vld [vmem:[#allocation2 + $0xf8] sm:$0xff]
        %v1364 = vld [vmem:[#allocation2 + $0x100] sm:$0xff]
        %v1365 = vld [vmem:[#allocation2 + $0x108] sm:$0xff]
        %v1366 = vld [vmem:[#allocation2 + $0x110] sm:$0xff]
        %v1367 = vld [vmem:[#allocation2 + $0x118] sm:$0xff]
        %v1368 = vld [vmem:[#allocation2 + $0x120] sm:$0xff]
        %v1369 = vld [vmem:[#allocation2 + $0x128] sm:$0xff]
        %v1370 = vld [vmem:[#allocation2 + $0x130] sm:$0xff]
        %v1371 = vld [vmem:[#allocation2 + $0x138] sm:$0xff]
        %v1372 = vld [vmem:[#allocation2 + $0x140] sm:$0xff]
        %v1373 = vld [vmem:[#allocation2 + $0x148] sm:$0xff]
        %v1374 = vld [vmem:[#allocation2 + $0x150] sm:$0xff]
        %v1375 = vld [vmem:[#allocation2 + $0x158] sm:$0xff]
        %v1376 = vld [vmem:[#allocation2 + $0x160] sm:$0xff]
        %v1377 = vld [vmem:[#allocation2 + $0x168] sm:$0xff]
        %v1378 = vld [vmem:[#allocation2 + $0x170] sm:$0xff]
        %v1379 = vld [vmem:[#allocation2 + $0x178] sm:$0xff]
        %v1380 = vld [vmem:[#allocation2 + $0x180] sm:$0xff]
        %v1381 = vld [vmem:[#allocation2 + $0x188] sm:$0xff]
        %v1382 = vld [vmem:[#allocation2 + $0x190] sm:$0xff]
        %v1383 = vld [vmem:[#allocation2 + $0x198] sm:$0xff]
        %v1384 = vld [vmem:[#allocation2 + $0x1a0] sm:$0xff]
        %v1385 = vld [vmem:[#allocation2 + $0x1a8] sm:$0xff]
        %v1386 = vld [vmem:[#allocation2 + $0x1b0] sm:$0xff]
        %v1387 = vld [vmem:[#allocation2 + $0x1b8] sm:$0xff]
        %v1388 = vld [vmem:[#allocation2 + $0x1c0] sm:$0xff]
        %v1389 = vld [vmem:[#allocation2 + $0x1c8] sm:$0xff]
        %v1390 = vld [vmem:[#allocation2 + $0x1d0] sm:$0xff]
        %v1391 = vld [vmem:[#allocation2 + $0x1d8] sm:$0xff]
        %v1392 = vld [vmem:[#allocation2 + $0x1e0] sm:$0xff]
        %v1393 = vld [vmem:[#allocation2 + $0x1e8] sm:$0xff]
        %v1394 = vld [vmem:[#allocation2 + $0x1f0] sm:$0xff]
        %v1395 = vld [vmem:[#allocation2 + $0x1f8] sm:$0xff]
        %v1396 = vld [vmem:[%s257] sm:$0x1]
        %v1398 = vlaneseq
        %v1399 = vshrl.u32 %v1398, 7
        %v1400 = vsub.s32 0, %v1399
        %v1401 = vrot.slane %v1396, %v1400
        %v1403 = vadd.f32 %v1332, %v1401
        %v1404 = vadd.f32 %v1333, %v1401
        %v1405 = vadd.f32 %v1334, %v1401
        %v1406 = vadd.f32 %v1335, %v1401
        %v1407 = vadd.f32 %v1336, %v1401
        %v1408 = vadd.f32 %v1337, %v1401
        %v1409 = vadd.f32 %v1338, %v1401
        %v1410 = vadd.f32 %v1339, %v1401
        %v1411 = vadd.f32 %v1340, %v1401
        %v1412 = vadd.f32 %v1341, %v1401
        %v1413 = vadd.f32 %v1342, %v1401
        %v1414 = vadd.f32 %v1343, %v1401
        %v1415 = vadd.f32 %v1344, %v1401
        %v1416 = vadd.f32 %v1345, %v1401
        %v1417 = vadd.f32 %v1346, %v1401
        %v1418 = vadd.f32 %v1347, %v1401
        %v1419 = vadd.f32 %v1348, %v1401
        %v1420 = vadd.f32 %v1349, %v1401
        %v1421 = vadd.f32 %v1350, %v1401
        %v1422 = vadd.f32 %v1351, %v1401
        %v1423 = vadd.f32 %v1352, %v1401
        %v1424 = vadd.f32 %v1353, %v1401
        %v1425 = vadd.f32 %v1354, %v1401
        %v1426 = vadd.f32 %v1355, %v1401
        %v1427 = vadd.f32 %v1356, %v1401
        %v1428 = vadd.f32 %v1357, %v1401
        %v1429 = vadd.f32 %v1358, %v1401
        %v1430 = vadd.f32 %v1359, %v1401
        %v1431 = vadd.f32 %v1360, %v1401
        %v1432 = vadd.f32 %v1361, %v1401
        %v1433 = vadd.f32 %v1362, %v1401
        %v1434 = vadd.f32 %v1363, %v1401
        %v1435 = vadd.f32 %v1364, %v1401
        %v1436 = vadd.f32 %v1365, %v1401
        %v1437 = vadd.f32 %v1366, %v1401
        %v1438 = vadd.f32 %v1367, %v1401
        %v1439 = vadd.f32 %v1368, %v1401
        %v1440 = vadd.f32 %v1369, %v1401
        %v1441 = vadd.f32 %v1370, %v1401
        %v1442 = vadd.f32 %v1371, %v1401
        %v1443 = vadd.f32 %v1372, %v1401
        %v1444 = vadd.f32 %v1373, %v1401
        %v1445 = vadd.f32 %v1374, %v1401
        %v1446 = vadd.f32 %v1375, %v1401
        %v1447 = vadd.f32 %v1376, %v1401
        %v1448 = vadd.f32 %v1377, %v1401
        %v1449 = vadd.f32 %v1378, %v1401
        %v1450 = vadd.f32 %v1379, %v1401
        %v1451 = vadd.f32 %v1380, %v1401
        %v1452 = vadd.f32 %v1381, %v1401
        %v1453 = vadd.f32 %v1382, %v1401
        %v1454 = vadd.f32 %v1383, %v1401
        %v1455 = vadd.f32 %v1384, %v1401
        %v1456 = vadd.f32 %v1385, %v1401
        %v1457 = vadd.f32 %v1386, %v1401
        %v1458 = vadd.f32 %v1387, %v1401
        %v1459 = vadd.f32 %v1388, %v1401
        %v1460 = vadd.f32 %v1389, %v1401
        %v1461 = vadd.f32 %v1390, %v1401
        %v1462 = vadd.f32 %v1391, %v1401
        %v1463 = vadd.f32 %v1392, %v1401
        %v1464 = vadd.f32 %v1393, %v1401
        %v1465 = vadd.f32 %v1394, %v1401
        %v1466 = vadd.f32 %v1395, %v1401
        %v1467 = vmax.f32 %v1403, 0.0
        %v1468 = vmax.f32 %v1404, 0.0
        %v1469 = vmax.f32 %v1405, 0.0
        %v1470 = vmax.f32 %v1406, 0.0
        %v1471 = vmax.f32 %v1407, 0.0
        %v1472 = vmax.f32 %v1408, 0.0
        %v1473 = vmax.f32 %v1409, 0.0
        %v1474 = vmax.f32 %v1410, 0.0
        %v1475 = vmax.f32 %v1411, 0.0
        %v1476 = vmax.f32 %v1412, 0.0
        %v1477 = vmax.f32 %v1413, 0.0
        %v1478 = vmax.f32 %v1414, 0.0
        %v1479 = vmax.f32 %v1415, 0.0
        %v1480 = vmax.f32 %v1416, 0.0
        %v1481 = vmax.f32 %v1417, 0.0
        %v1482 = vmax.f32 %v1418, 0.0
        %v1483 = vmax.f32 %v1419, 0.0
        %v1484 = vmax.f32 %v1420, 0.0
        %v1485 = vmax.f32 %v1421, 0.0
        %v1486 = vmax.f32 %v1422, 0.0
        %v1487 = vmax.f32 %v1423, 0.0
        %v1488 = vmax.f32 %v1424, 0.0
        %v1489 = vmax.f32 %v1425, 0.0
        %v1490 = vmax.f32 %v1426, 0.0
        %v1491 = vmax.f32 %v1427, 0.0
        %v1492 = vmax.f32 %v1428, 0.0
        %v1493 = vmax.f32 %v1429, 0.0
        %v1494 = vmax.f32 %v1430, 0.0
        %v1495 = vmax.f32 %v1431, 0.0
        %v1496 = vmax.f32 %v1432, 0.0
        %v1497 = vmax.f32 %v1433, 0.0
        %v1498 = vmax.f32 %v1434, 0.0
        %v1499 = vmax.f32 %v1435, 0.0
        %v1500 = vmax.f32 %v1436, 0.0
        %v1501 = vmax.f32 %v1437, 0.0
        %v1502 = vmax.f32 %v1438, 0.0
        %v1503 = vmax.f32 %v1439, 0.0
        %v1504 = vmax.f32 %v1440, 0.0
        %v1505 = vmax.f32 %v1441, 0.0
        %v1506 = vmax.f32 %v1442, 0.0
        %v1507 = vmax.f32 %v1443, 0.0
        %v1508 = vmax.f32 %v1444, 0.0
        %v1509 = vmax.f32 %v1445, 0.0
        %v1510 = vmax.f32 %v1446, 0.0
        %v1511 = vmax.f32 %v1447, 0.0
        %v1512 = vmax.f32 %v1448, 0.0
        %v1513 = vmax.f32 %v1449, 0.0
        %v1514 = vmax.f32 %v1450, 0.0
        %v1515 = vmax.f32 %v1451, 0.0
        %v1516 = vmax.f32 %v1452, 0.0
        %v1517 = vmax.f32 %v1453, 0.0
        %v1518 = vmax.f32 %v1454, 0.0
        %v1519 = vmax.f32 %v1455, 0.0
        %v1520 = vmax.f32 %v1456, 0.0
        %v1521 = vmax.f32 %v1457, 0.0
        %v1522 = vmax.f32 %v1458, 0.0
        %v1523 = vmax.f32 %v1459, 0.0
        %v1524 = vmax.f32 %v1460, 0.0
        %v1525 = vmax.f32 %v1461, 0.0
        %v1526 = vmax.f32 %v1462, 0.0
        %v1527 = vmax.f32 %v1463, 0.0
        %v1528 = vmax.f32 %v1464, 0.0
        %v1529 = vmax.f32 %v1465, 0.0
        %v1530 = vmax.f32 %v1466, 0.0
        %v1531 = vpack.c.bf16 %v1468, %v1467
        %v1532 = vpack.c.bf16 %v1470, %v1469
        %v1533 = vpack.c.bf16 %v1472, %v1471
        %v1534 = vpack.c.bf16 %v1474, %v1473
        %v1535 = vpack.c.bf16 %v1476, %v1475
        %v1536 = vpack.c.bf16 %v1478, %v1477
        %v1537 = vpack.c.bf16 %v1480, %v1479
        %v1538 = vpack.c.bf16 %v1482, %v1481
        %v1539 = vpack.c.bf16 %v1484, %v1483
        %v1540 = vpack.c.bf16 %v1486, %v1485
        %v1541 = vpack.c.bf16 %v1488, %v1487
        %v1542 = vpack.c.bf16 %v1490, %v1489
        %v1543 = vpack.c.bf16 %v1492, %v1491
        %v1544 = vpack.c.bf16 %v1494, %v1493
        %v1545 = vpack.c.bf16 %v1496, %v1495
        %v1546 = vpack.c.bf16 %v1498, %v1497
        %v1547 = vpack.c.bf16 %v1500, %v1499
        %v1548 = vpack.c.bf16 %v1502, %v1501
        %v1549 = vpack.c.bf16 %v1504, %v1503
        %v1550 = vpack.c.bf16 %v1506, %v1505
        %v1551 = vpack.c.bf16 %v1508, %v1507
        %v1552 = vpack.c.bf16 %v1510, %v1509
        %v1553 = vpack.c.bf16 %v1512, %v1511
        %v1554 = vpack.c.bf16 %v1514, %v1513
        %v1555 = vpack.c.bf16 %v1516, %v1515
        %v1556 = vpack.c.bf16 %v1518, %v1517
        %v1557 = vpack.c.bf16 %v1520, %v1519
        %v1558 = vpack.c.bf16 %v1522, %v1521
        %v1559 = vpack.c.bf16 %v1524, %v1523
        %v1560 = vpack.c.bf16 %v1526, %v1525
        %v1561 = vpack.c.bf16 %v1528, %v1527
        %v1562 = vpack.c.bf16 %v1530, %v1529
        %v1595 = vunpack.c.l.b16 %v1531
        %v1596 = vunpack.c.h.b16 %v1531
        %v1597 = vunpack.c.l.b16 %v1532
        %v1598 = vunpack.c.h.b16 %v1532
        %v1599 = vunpack.c.l.b16 %v1533
        %v1600 = vunpack.c.h.b16 %v1533
        %v1601 = vunpack.c.l.b16 %v1534
        %v1602 = vunpack.c.h.b16 %v1534
        %v1603 = vunpack.c.l.b16 %v1535
        %v1604 = vunpack.c.h.b16 %v1535
        %v1605 = vunpack.c.l.b16 %v1536
        %v1606 = vunpack.c.h.b16 %v1536
        %v1607 = vunpack.c.l.b16 %v1537
        %v1608 = vunpack.c.h.b16 %v1537
        %v1609 = vunpack.c.l.b16 %v1538
        %v1610 = vunpack.c.h.b16 %v1538
        %v1611 = vunpack.c.l.b16 %v1539
        %v1612 = vunpack.c.h.b16 %v1539
        %v1613 = vunpack.c.l.b16 %v1540
        %v1614 = vunpack.c.h.b16 %v1540
        %v1615 = vunpack.c.l.b16 %v1541
        %v1616 = vunpack.c.h.b16 %v1541
        %v1617 = vunpack.c.l.b16 %v1542
        %v1618 = vunpack.c.h.b16 %v1542
        %v1619 = vunpack.c.l.b16 %v1543
        %v1620 = vunpack.c.h.b16 %v1543
        %v1621 = vunpack.c.l.b16 %v1544
        %v1622 = vunpack.c.h.b16 %v1544
        %v1623 = vunpack.c.l.b16 %v1545
        %v1624 = vunpack.c.h.b16 %v1545
        %v1625 = vunpack.c.l.b16 %v1546
        %v1626 = vunpack.c.h.b16 %v1546
        %v1627 = vunpack.c.l.b16 %v1547
        %v1628 = vunpack.c.h.b16 %v1547
        %v1629 = vunpack.c.l.b16 %v1548
        %v1630 = vunpack.c.h.b16 %v1548
        %v1631 = vunpack.c.l.b16 %v1549
        %v1632 = vunpack.c.h.b16 %v1549
        %v1633 = vunpack.c.l.b16 %v1550
        %v1634 = vunpack.c.h.b16 %v1550
        %v1635 = vunpack.c.l.b16 %v1551
        %v1636 = vunpack.c.h.b16 %v1551
        %v1637 = vunpack.c.l.b16 %v1552
        %v1638 = vunpack.c.h.b16 %v1552
        %v1639 = vunpack.c.l.b16 %v1553
        %v1640 = vunpack.c.h.b16 %v1553
        %v1641 = vunpack.c.l.b16 %v1554
        %v1642 = vunpack.c.h.b16 %v1554
        %v1643 = vunpack.c.l.b16 %v1555
        %v1644 = vunpack.c.h.b16 %v1555
        %v1645 = vunpack.c.l.b16 %v1556
        %v1646 = vunpack.c.h.b16 %v1556
        %v1647 = vunpack.c.l.b16 %v1557
        %v1648 = vunpack.c.h.b16 %v1557
        %v1649 = vunpack.c.l.b16 %v1558
        %v1650 = vunpack.c.h.b16 %v1558
        %v1651 = vunpack.c.l.b16 %v1559
        %v1652 = vunpack.c.h.b16 %v1559
        %v1653 = vunpack.c.l.b16 %v1560
        %v1654 = vunpack.c.h.b16 %v1560
        %v1655 = vunpack.c.l.b16 %v1561
        %v1656 = vunpack.c.h.b16 %v1561
        %v1657 = vunpack.c.l.b16 %v1562
        %v1658 = vunpack.c.h.b16 %v1562
        %v1659 = vpack.c.b16 %v1595, %v1595
        %v1660 = vpack.c.b16 %v1596, %v1596
        %v1661 = vpack.c.b16 %v1597, %v1597
        %v1662 = vpack.c.b16 %v1598, %v1598
        %v1663 = vpack.c.b16 %v1599, %v1599
        %v1664 = vpack.c.b16 %v1600, %v1600
        %v1665 = vpack.c.b16 %v1601, %v1601
        %v1666 = vpack.c.b16 %v1602, %v1602
        %v1667 = vpack.c.b16 %v1603, %v1603
        %v1668 = vpack.c.b16 %v1604, %v1604
        %v1669 = vpack.c.b16 %v1605, %v1605
        %v1670 = vpack.c.b16 %v1606, %v1606
        %v1671 = vpack.c.b16 %v1607, %v1607
        %v1672 = vpack.c.b16 %v1608, %v1608
        %v1673 = vpack.c.b16 %v1609, %v1609
        %v1674 = vpack.c.b16 %v1610, %v1610
        %v1675 = vpack.c.b16 %v1611, %v1611
        %v1676 = vpack.c.b16 %v1612, %v1612
        %v1677 = vpack.c.b16 %v1613, %v1613
        %v1678 = vpack.c.b16 %v1614, %v1614
        %v1679 = vpack.c.b16 %v1615, %v1615
        %v1680 = vpack.c.b16 %v1616, %v1616
        %v1681 = vpack.c.b16 %v1617, %v1617
        %v1682 = vpack.c.b16 %v1618, %v1618
        %v1683 = vpack.c.b16 %v1619, %v1619
        %v1684 = vpack.c.b16 %v1620, %v1620
        %v1685 = vpack.c.b16 %v1621, %v1621
        %v1686 = vpack.c.b16 %v1622, %v1622
        %v1687 = vpack.c.b16 %v1623, %v1623
        %v1688 = vpack.c.b16 %v1624, %v1624
        %v1689 = vpack.c.b16 %v1625, %v1625
        %v1690 = vpack.c.b16 %v1626, %v1626
        %v1691 = vpack.c.b16 %v1627, %v1627
        %v1692 = vpack.c.b16 %v1628, %v1628
        %v1693 = vpack.c.b16 %v1629, %v1629
        %v1694 = vpack.c.b16 %v1630, %v1630
        %v1695 = vpack.c.b16 %v1631, %v1631
        %v1696 = vpack.c.b16 %v1632, %v1632
        %v1697 = vpack.c.b16 %v1633, %v1633
        %v1698 = vpack.c.b16 %v1634, %v1634
        %v1699 = vpack.c.b16 %v1635, %v1635
        %v1700 = vpack.c.b16 %v1636, %v1636
        %v1701 = vpack.c.b16 %v1637, %v1637
        %v1702 = vpack.c.b16 %v1638, %v1638
        %v1703 = vpack.c.b16 %v1639, %v1639
        %v1704 = vpack.c.b16 %v1640, %v1640
        %v1705 = vpack.c.b16 %v1641, %v1641
        %v1706 = vpack.c.b16 %v1642, %v1642
        %v1707 = vpack.c.b16 %v1643, %v1643
        %v1708 = vpack.c.b16 %v1644, %v1644
        %v1709 = vpack.c.b16 %v1645, %v1645
        %v1710 = vpack.c.b16 %v1646, %v1646
        %v1711 = vpack.c.b16 %v1647, %v1647
        %v1712 = vpack.c.b16 %v1648, %v1648
        %v1713 = vpack.c.b16 %v1649, %v1649
        %v1714 = vpack.c.b16 %v1650, %v1650
        %v1715 = vpack.c.b16 %v1651, %v1651
        %v1716 = vpack.c.b16 %v1652, %v1652
        %v1717 = vpack.c.b16 %v1653, %v1653
        %v1718 = vpack.c.b16 %v1654, %v1654
        %v1719 = vpack.c.b16 %v1655, %v1655
        %v1720 = vpack.c.b16 %v1656, %v1656
        %v1721 = vpack.c.b16 %v1657, %v1657
        %v1722 = vpack.c.b16 %v1658, %v1658
        %1787 = vst [vmem:[%s265] sm:$0xf] %v1659
        %1788 = vst [vmem:[%s265 + $0x4] sm:$0xf] %v1660
        %1789 = vst [vmem:[%s265 + $0x8] sm:$0xf] %v1661
        %1790 = vst [vmem:[%s265 + $0xc] sm:$0xf] %v1662
        %1791 = vst [vmem:[%s265 + $0x10] sm:$0xf] %v1663
        %1792 = vst [vmem:[%s265 + $0x14] sm:$0xf] %v1664
        %1793 = vst [vmem:[%s265 + $0x18] sm:$0xf] %v1665
        %1794 = vst [vmem:[%s265 + $0x1c] sm:$0xf] %v1666
        %1795 = vst [vmem:[%s265 + $0x20] sm:$0xf] %v1667
        %1796 = vst [vmem:[%s265 + $0x24] sm:$0xf] %v1668
        %1797 = vst [vmem:[%s265 + $0x28] sm:$0xf] %v1669
        %1798 = vst [vmem:[%s265 + $0x2c] sm:$0xf] %v1670
        %1799 = vst [vmem:[%s265 + $0x30] sm:$0xf] %v1671
        %1800 = vst [vmem:[%s265 + $0x34] sm:$0xf] %v1672
        %1801 = vst [vmem:[%s265 + $0x38] sm:$0xf] %v1673
        %1802 = vst [vmem:[%s265 + $0x3c] sm:$0xf] %v1674
        %1803 = vst [vmem:[%s265 + $0x40] sm:$0xf] %v1675
        %1804 = vst [vmem:[%s265 + $0x44] sm:$0xf] %v1676
        %1805 = vst [vmem:[%s265 + $0x48] sm:$0xf] %v1677
        %1806 = vst [vmem:[%s265 + $0x4c] sm:$0xf] %v1678
        %1807 = vst [vmem:[%s265 + $0x50] sm:$0xf] %v1679
        %1808 = vst [vmem:[%s265 + $0x54] sm:$0xf] %v1680
        %1809 = vst [vmem:[%s265 + $0x58] sm:$0xf] %v1681
        %1810 = vst [vmem:[%s265 + $0x5c] sm:$0xf] %v1682
        %1811 = vst [vmem:[%s265 + $0x60] sm:$0xf] %v1683
        %1812 = vst [vmem:[%s265 + $0x64] sm:$0xf] %v1684
        %1813 = vst [vmem:[%s265 + $0x68] sm:$0xf] %v1685
        %1814 = vst [vmem:[%s265 + $0x6c] sm:$0xf] %v1686
        %1815 = vst [vmem:[%s265 + $0x70] sm:$0xf] %v1687
        %1816 = vst [vmem:[%s265 + $0x74] sm:$0xf] %v1688
        %1817 = vst [vmem:[%s265 + $0x78] sm:$0xf] %v1689
        %1818 = vst [vmem:[%s265 + $0x7c] sm:$0xf] %v1690
        %1819 = vst [vmem:[%s265 + $0x80] sm:$0xf] %v1691
        %1820 = vst [vmem:[%s265 + $0x84] sm:$0xf] %v1692
        %1821 = vst [vmem:[%s265 + $0x88] sm:$0xf] %v1693
        %1822 = vst [vmem:[%s265 + $0x8c] sm:$0xf] %v1694
        %1823 = vst [vmem:[%s265 + $0x90] sm:$0xf] %v1695
        %1824 = vst [vmem:[%s265 + $0x94] sm:$0xf] %v1696
        %1825 = vst [vmem:[%s265 + $0x98] sm:$0xf] %v1697
        %1826 = vst [vmem:[%s265 + $0x9c] sm:$0xf] %v1698
        %1827 = vst [vmem:[%s265 + $0xa0] sm:$0xf] %v1699
        %1828 = vst [vmem:[%s265 + $0xa4] sm:$0xf] %v1700
        %1829 = vst [vmem:[%s265 + $0xa8] sm:$0xf] %v1701
        %1830 = vst [vmem:[%s265 + $0xac] sm:$0xf] %v1702
        %1831 = vst [vmem:[%s265 + $0xb0] sm:$0xf] %v1703
        %1832 = vst [vmem:[%s265 + $0xb4] sm:$0xf] %v1704
        %1833 = vst [vmem:[%s265 + $0xb8] sm:$0xf] %v1705
        %1834 = vst [vmem:[%s265 + $0xbc] sm:$0xf] %v1706
        %1835 = vst [vmem:[%s265 + $0xc0] sm:$0xf] %v1707
        %1836 = vst [vmem:[%s265 + $0xc4] sm:$0xf] %v1708
        %1837 = vst [vmem:[%s265 + $0xc8] sm:$0xf] %v1709
        %1838 = vst [vmem:[%s265 + $0xcc] sm:$0xf] %v1710
        %1839 = vst [vmem:[%s265 + $0xd0] sm:$0xf] %v1711
        %1840 = vst [vmem:[%s265 + $0xd4] sm:$0xf] %v1712
        %1841 = vst [vmem:[%s265 + $0xd8] sm:$0xf] %v1713
        %1842 = vst [vmem:[%s265 + $0xdc] sm:$0xf] %v1714
        %1843 = vst [vmem:[%s265 + $0xe0] sm:$0xf] %v1715
        %1844 = vst [vmem:[%s265 + $0xe4] sm:$0xf] %v1716
        %1845 = vst [vmem:[%s265 + $0xe8] sm:$0xf] %v1717
        %1846 = vst [vmem:[%s265 + $0xec] sm:$0xf] %v1718
        %1847 = vst [vmem:[%s265 + $0xf0] sm:$0xf] %v1719
        %1848 = vst [vmem:[%s265 + $0xf4] sm:$0xf] %v1720
        %1849 = vst [vmem:[%s265 + $0xf8] sm:$0xf] %v1721
        %1850 = vst [vmem:[%s265 + $0xfc] sm:$0xf] %v1722
      $region40: #{fused_matmul.1} parent=31 // pred_fallthru
        _
      %s1851 = smul.u32 64, %s19
      %p1852 = scmp.lt.s32.totalorder %s1851, 255
      %s1853 = scalar_select %p1852, %s1851, 255
      %p1854 = scmp.lt.s32.totalorder %s20, 0
      %s1855 = scalar_select %p1854, %s20, 0
      %s1856 = sadd.s32 %s1855, %s1853
      %s1857 = smul.addr %s1856, 4
      %s1858 = scalar_lea.vmem %s3, %s1857
      // Predicated region
      $region41: #{fused_matmul.1} parent=31 // pred_check
        %p1859 = pneg %p135
      $region42: #{fused_matmul.1} parent=31 // pred_check_branch
        %1861 = sbr.rel (%p1859) target = $region44
      $region43: #{fused_matmul.1} parent=31 // pred_region
        %s1862 = smul.u32 64, %s19
      $region44: #{fused_matmul.1} parent=31 // pred_fallthru
        _
    $region32: #{fused_matmul.1} parent=5 // pred_fallthru
      _
    %p1863 = scmp.le.s32.totalorder 2, %s9
    // Predicated region
    $region45: #{fused_matmul.1} parent=5 // pred_check
      %p1864 = pneg %p1863
    $region46: #{fused_matmul.1} parent=5 // pred_check_branch
      %1866 = sbr.rel (%p1864) target = $region48
    $region47: #{fused_matmul.1} parent=5 // pred_region
      %s1867 = ssub.s32 %s9, 2
      // Predicated region
      $region49: #{fused_matmul.1} parent=47 // pred_check
        %p1868 = pneg %p141
      $region50: #{fused_matmul.1} parent=47 // pred_check_branch
        %1870 = sbr.rel (%p1868) target = $region52
      $region51: #{fused_matmul.1} parent=47 // pred_region
        %s1871 = smul.u32 64, %s22
        %p1872 = scmp.lt.s32.totalorder %s1871, 255
        %s1873 = scalar_select %p1872, %s1871, 255
        %p1874 = scmp.lt.s32.totalorder %s23, 0
        %s1875 = scalar_select %p1874, %s23, 0
        %s1876 = sadd.s32 %s1875, %s1873
        %s1877 = smul.addr %s1876, 4
        %s1878 = scalar_lea.vmem %s3, %s1877
      $region52: #{fused_matmul.1} parent=47 // pred_fallthru
        _
    $region48: #{fused_matmul.1} parent=5 // pred_fallthru
      _
  $region6: #{fused_matmul.1} parent=0 // loop_footer
    %s13 = sadd.s32 1, %s9
  $region7: #{fused_matmul.1} parent=0 // loop_footer_branch
    %8 = sbr.rel target = $region3
  $region8: #{fused_matmul.1} parent=0 // loop_exit
    _

</llo_original>
